<compile_context>
chip_gen: v7x
topology: tpu7x:2x2x1
jax: 0.10.0
libtpu: 0.0.40
codegen_flags: <defaults>
</compile_context>

<pallas_src>
import jax
import jax.numpy as jnp
from jax.experimental import pallas as pl
from jax.experimental.pallas import tpu as pltpu


def _round_up(x, m):
    return ((x + m - 1) // m) * m


def _lstm_kernel(blkmax_ref, lens_ref, xg_ref, w_hh_hbm, h_out_ref,
                 h_sc, c_sc, w_sc, dma_sem):
    """One (batch_block, time_block) grid step.

    blkmax_ref : (n_bblk,) int32 SMEM   per-batch-block max sequence length
    lens_ref   : (BB, 128) int32        per-row lengths (lane-padded)
    xg_ref     : (TT, BB, 4*Hp)         hoisted pre-activations (time-major)
    w_hh_hbm   : (Hp, 4*Hp)             recurrent weight, left in HBM (pl.ANY)
    h_out_ref  : (BB, Hp)               final hidden state
    h_sc, c_sc : (BB, Hp) f32           recurrent state (persists over t blocks)
    w_sc       : (Hp, 4*Hp)             VMEM copy of W_hh^T (single copy)
    """
    b_blk = pl.program_id(0)
    t_blk = pl.program_id(1)
    n_tblk = pl.num_programs(1)
    TT = xg_ref.shape[0]
    Hp = h_sc.shape[1]
    t0 = t_blk * TT

    @pl.when(t_blk == 0)
    def _init():
        h_sc[...] = jnp.zeros_like(h_sc)
        c_sc[...] = jnp.zeros_like(c_sc)
        # Constant weight: one HBM -> VMEM copy per batch block (scratch
        # persists across the time axis).  Exposure is a single small DMA
        # per batch block; with large BB, n_bblk is tiny so this is noise.
        cp = pltpu.make_async_copy(w_hh_hbm, w_sc, dma_sem)
        cp.start()
        cp.wait()

    # Early exit: skip whole time chunks past this batch block's longest
    # sequence (lengths are descending for packed sequences, but blkmax is
    # computed robustly in the wrapper either way).
    blk_max = blkmax_ref[b_blk]

    @pl.when(t0 < blk_max)
    def _recur():
        w_hh = w_sc[...]                                   # (Hp, 4Hp)
        h0 = h_sc[...]
        c0 = c_sc[...]
        # Hoisted lane-broadcast of the per-row lengths (one per grid step).
        lens_b = jnp.broadcast_to(lens_ref[...][:, :1], h0.shape)

        def body(tt, carry):
            h, c = carry
            xg_t = xg_ref[tt].astype(jnp.float32)          # (BB, 4Hp), full tile
            gates = jnp.dot(h.astype(w_hh.dtype), w_hh,
                            preferred_element_type=jnp.float32) + xg_t
            # PyTorch LSTM gate order: i, f, g, o.  Slices are lane-aligned
            # because Hp is a multiple of 128.
            i = jax.nn.sigmoid(gates[:, 0 * Hp:1 * Hp])
            f = jax.nn.sigmoid(gates[:, 1 * Hp:2 * Hp])
            g = jnp.tanh(gates[:, 2 * Hp:3 * Hp])
            o = jax.nn.sigmoid(gates[:, 3 * Hp:4 * Hp])
            c_new = f * c + i * g
            h_new = o * jnp.tanh(c_new)
            # pack_padded_sequence semantics: freeze state once t >= len[b].
            valid = (t0 + tt) < lens_b
            h = jnp.where(valid, h_new, h)
            c = jnp.where(valid, c_new, c)
            return (h, c)

        h, c = jax.lax.fori_loop(0, TT, body, (h0, c0), unroll=True)
        h_sc[...] = h
        c_sc[...] = c

    @pl.when(t_blk == n_tblk - 1)
    def _finalize():
        h_out_ref[...] = h_sc[...].astype(h_out_ref.dtype)


def lstm_encoder_forward(embeds, seq_lens, w_ih, w_hh, b_ih, b_hh,
                         *, weight_dtype=jnp.bfloat16, tt_chunk=16):
    """Pallas port of LstmEncoder.forward.

    embeds: (B, T, E); seq_lens: (B,) int.
    w_ih: (4H, E), w_hh: (4H, H), b_ih/b_hh: (4H,) -- PyTorch nn.LSTM layout.
    Returns (B, H) == hn[-1].
    weight_dtype only affects the MXU operands (W_hh and the per-step cast of
    h); xg, bias, state and gate math stay f32.
    """
    B, T, E = embeds.shape
    H = w_hh.shape[1]
    f32 = jnp.float32

    # --- vreg-aligned padded sizes -----------------------------------------
    Hp = _round_up(H, 128)                       # lane-aligned hidden
    BB = min(_round_up(B, 8), 128)               # adaptive batch block
    Bp = _round_up(B, BB)
    # Keep >= 2 batch blocks when the batch is big enough so v7x's second
    # TensorCore gets work on the "parallel" axis.
    if Bp // BB == 1 and BB > 8:
        BB = max(8, _round_up(BB // 2, 8))
        Bp = _round_up(B, BB)
    n_bblk = Bp // BB

    wd_size = jnp.dtype(weight_dtype).itemsize
    out_size = jnp.dtype(embeds.dtype).itemsize

    def _vmem_bytes(tt):
        return (2 * tt * BB * 4 * Hp * 4          # xg block f32, double-buffered
                + 2 * BB * 128 * 4                # lens block
                + 2 * BB * Hp * out_size          # output block
                + Hp * 4 * Hp * wd_size           # W_hh^T scratch (single copy)
                + 2 * BB * Hp * 4)                # h / c scratch

    # --- VMEM budget from the actual chip (v5e/v6e: 128 MiB, v7x: 64 MiB) --
    try:
        vmem_cap = int(pltpu.get_tpu_info().vmem_capacity_bytes)
    except Exception:
        vmem_cap = 64 << 20                       # conservative (v7x size)
    budget = int(0.80 * vmem_cap)                 # headroom for compiler scratch

    TT = max(1, min(tt_chunk, T))
    while TT > 1 and _vmem_bytes(TT) > budget:
        TT //= 2
    Tp = _round_up(T, TT)
    n_tblk = Tp // TT

    est = _vmem_bytes(TT)
    vmem_limit = max(min(int(1.2 * est) + (2 << 20), budget), 1 << 20)

    # --- repack weights per gate into the padded hidden size ---------------
    w_ih4 = jnp.zeros((4, Hp, E), f32).at[:, :H, :].set(
        w_ih.reshape(4, H, E).astype(f32))
    w_hh4 = jnp.zeros((4, Hp, Hp), f32).at[:, :H, :H].set(
        w_hh.reshape(4, H, H).astype(f32))
    bias4 = jnp.zeros((4, Hp), f32).at[:, :H].set(
        (b_ih + b_hh).reshape(4, H).astype(f32))
    w_ih_t = w_ih4.reshape(4 * Hp, E).T                          # (E, 4Hp) f32
    w_hh_t = w_hh4.reshape(4 * Hp, Hp).T.astype(weight_dtype)    # (Hp, 4Hp)
    bias = bias4.reshape(4 * Hp)

    # --- pad activations / lengths (zero-length pad rows never update) -----
    x_p = jnp.zeros((Tp, Bp, E), f32).at[:T, :B, :].set(
        jnp.transpose(embeds, (1, 0, 2)).astype(f32))            # time-major
    lens_p = jnp.zeros((Bp,), jnp.int32).at[:B].set(seq_lens.astype(jnp.int32))
    lens2d = jnp.broadcast_to(lens_p[:, None], (Bp, 128))        # tiny mask input
    blkmax = jnp.max(lens_p.reshape(n_bblk, BB), axis=1).astype(jnp.int32)

    # --- hoisted input projection: one big matmul over all timesteps -------
    # TODO(synk): for very long T with small E, fuse this projection into the
    # kernel to avoid the (Tp, Bp, 4Hp) HBM round trip.
    xg = jnp.dot(x_p.reshape(Tp * Bp, E), w_ih_t,
                 preferred_element_type=f32)
    xg = (xg + bias[None, :]).reshape(Tp, Bp, 4 * Hp)            # f32, time-major

    grid_spec = pltpu.PrefetchScalarGridSpec(
        num_scalar_prefetch=1,                                    # blkmax -> SMEM
        grid=(n_bblk, n_tblk),
        in_specs=[
            pl.BlockSpec((BB, 128), lambda b, t, m: (b, 0)),          # lens
            pl.BlockSpec((TT, BB, 4 * Hp), lambda b, t, m: (t, b, 0)),  # xg
            pl.BlockSpec(memory_space=pl.ANY),                        # W_hh^T
        ],
        out_specs=pl.BlockSpec((BB, Hp), lambda b, t, m: (b, 0)),
        scratch_shapes=[
            pltpu.VMEM((BB, Hp), jnp.float32),        # h state
            pltpu.VMEM((BB, Hp), jnp.float32),        # c state
            pltpu.VMEM((Hp, 4 * Hp), weight_dtype),   # W_hh^T single copy
            pltpu.SemaphoreType.DMA(()),              # weight-copy semaphore
        ],
    )

    out_p = pl.pallas_call(
        _lstm_kernel,
        out_shape=jax.ShapeDtypeStruct((Bp, Hp), embeds.dtype),
        grid_spec=grid_spec,
        compiler_params=pltpu.CompilerParams(
            dimension_semantics=("parallel", "arbitrary"),
            vmem_limit_bytes=vmem_limit),
    )(blkmax, lens2d, xg, w_hh_t)

    return out_p[:B, :H]


def lstm_encoder_ref(embeds, seq_lens, w_ih, w_hh, b_ih, b_hh):
    """Pure-JAX reference (matches PyTorch packed LSTM hn[-1])."""
    B, T, E = embeds.shape
    H = w_hh.shape[1]
    x_tbe = jnp.transpose(embeds, (1, 0, 2))

    def step(carry, inp):
        h, c = carry
        x_t, t = inp
        gates = x_t @ w_ih.T + h @ w_hh.T + b_ih + b_hh
        i = jax.nn.sigmoid(gates[:, :H])
        f = jax.nn.sigmoid(gates[:, H:2 * H])
        g = jnp.tanh(gates[:, 2 * H:3 * H])
        o = jax.nn.sigmoid(gates[:, 3 * H:])
        c_new = f * c + i * g
        h_new = o * jnp.tanh(c_new)
        m = (t < seq_lens)[:, None]
        return (jnp.where(m, h_new, h), jnp.where(m, c_new, c)), None

    init = (jnp.zeros((B, H), jnp.float32), jnp.zeros((B, H), jnp.float32))
    (h, _), _ = jax.lax.scan(step, init, (x_tbe, jnp.arange(T)))
    return h


if __name__ == "__main__":
    B, T, E, H = 4, 8, 16, 32

    key = jax.random.PRNGKey(0)
    k0, k1, k2, k3, k4 = jax.random.split(key, 5)

    embeds = jax.random.normal(k0, (B, T, E), dtype=jnp.float32)
    # Descending lengths (pack_padded_sequence default expects sorted).
    seq_lens = jnp.array([8, 6, 4, 1], dtype=jnp.int32)

    # Deterministic parameter init, PyTorch nn.LSTM shapes / uniform(-k, k).
    bound = 1.0 / jnp.sqrt(jnp.float32(H))
    w_ih = jax.random.uniform(k1, (4 * H, E), jnp.float32, -bound, bound)
    w_hh = jax.random.uniform(k2, (4 * H, H), jnp.float32, -bound, bound)
    b_ih = jax.random.uniform(k3, (4 * H,), jnp.float32, -bound, bound)
    b_hh = jax.random.uniform(k4, (4 * H,), jnp.float32, -bound, bound)

    ref = lstm_encoder_ref(embeds, seq_lens, w_ih, w_hh, b_ih, b_hh)

    # f32-weight path (bitwise-faithful to the PyTorch module's precision).
    out_f32 = lstm_encoder_forward(embeds, seq_lens, w_ih, w_hh, b_ih, b_hh,
                                   weight_dtype=jnp.float32)
    out_f32 = jax.block_until_ready(out_f32)
    assert out_f32.shape == (B, H)
    assert jnp.allclose(out_f32, ref, rtol=1e-4, atol=1e-4), "f32 mismatch vs reference"

    # Default path: bf16 W_hh (MXU operand only); xg/bias/state stay f32.
    out = lstm_encoder_forward(embeds, seq_lens, w_ih, w_hh, b_ih, b_hh)
    out = jax.block_until_ready(out)
    assert out.shape == (B, H)
    assert jnp.allclose(out, ref, rtol=2e-2, atol=2e-2), "bf16-weight mismatch vs reference"

    print("KERNEL_OK")
</pallas_src>

<mosaic_0001>
module attributes {stable_mosaic.version = 11 : i64} {
  func.func @_lstm_kernel(%arg0: i32, %arg1: i32, %arg2: memref<1xi32, #tpu.memory_space<smem>>, %arg3: memref<8x128xi32, #tpu.memory_space<vmem>>, %arg4: memref<8x8x512xf32, #tpu.memory_space<vmem>>, %arg5: memref<128x512xf32, #tpu.memory_space<any>>, %arg6: memref<8x128xf32, #tpu.memory_space<vmem>>, %arg7: memref<8x128xf32, #tpu.memory_space<vmem>>, %arg8: memref<8x128xf32, #tpu.memory_space<vmem>>, %arg9: memref<128x512xf32, #tpu.memory_space<vmem>>, %arg10: memref<!tpu.dma_semaphore, #tpu.memory_space<semaphore_mem>>) attributes {dimension_semantics = [#tpu.dimension_semantics<parallel>, #tpu.dimension_semantics<arbitrary>], iteration_bounds = array<i64: 1, 1>, scalar_prefetch = 1 : i64, scratch_operands = 4 : i64, tpu.core_type = #tpu.core_type<tc>, window_params = [{transform_indices = @transform_0, window_bounds = array<i64: 8, 128>}, {transform_indices = @transform_1, window_bounds = array<i64: 8, 8, 512>}, {}, {transform_indices = @transform_3, window_bounds = array<i64: 8, 128>}]} {
    %c8_i32 = arith.constant 8 : i32
    %0 = arith.muli %arg1, %c8_i32 : i32
    %c0_i32 = arith.constant 0 : i32
    %1 = arith.cmpi eq, %arg1, %c0_i32 : i32
    %2 = arith.extui %1 : i1 to i32
    %c0_i32_0 = arith.constant 0 : i32
    %3 = arith.cmpi ne, %2, %c0_i32_0 : i32
    scf.if %3 {
      %cst = arith.constant 0.000000e+00 : f32
      %12 = vector.broadcast %cst : f32 to vector<8x128xf32>
      %c0 = arith.constant 0 : index
      %c0_4 = arith.constant 0 : index
      %13 = vector.load %arg7[%c0, %c0_4] : memref<8x128xf32, #tpu.memory_space<vmem>>, vector<8x128xf32>
      tpu.vector_store %arg7[%c0, %c0_4], %12 {strides = array<i32>} : memref<8x128xf32, #tpu.memory_space<vmem>>, vector<8x128xf32>,
      %cst_5 = arith.constant 0.000000e+00 : f32
      %14 = vector.broadcast %cst_5 : f32 to vector<8x128xf32>
      %c0_6 = arith.constant 0 : index
      %c0_7 = arith.constant 0 : index
      %15 = vector.load %arg8[%c0_6, %c0_7] : memref<8x128xf32, #tpu.memory_space<vmem>>, vector<8x128xf32>
      tpu.vector_store %arg8[%c0_6, %c0_7], %14 {strides = array<i32>} : memref<8x128xf32, #tpu.memory_space<vmem>>, vector<8x128xf32>,
      tpu.enqueue_dma source(%arg5 : memref<128x512xf32, #tpu.memory_space<any>>) target(%arg9 : memref<128x512xf32, #tpu.memory_space<vmem>>) target_semaphore(%arg10 : memref<!tpu.dma_semaphore, #tpu.memory_space<semaphore_mem>>)
      tpu.wait_dma2 semaphore(%arg10 : memref<!tpu.dma_semaphore, #tpu.memory_space<semaphore_mem>>) src(%arg5 : memref<128x512xf32, #tpu.memory_space<any>>) dst(%arg9 : memref<128x512xf32, #tpu.memory_space<vmem>>)
    } else {
    }
    %4 = arith.index_cast %arg0 : i32 to index
    %5 = memref.load %arg2[%4] : memref<1xi32, #tpu.memory_space<smem>>
    %6 = arith.cmpi slt, %0, %5 : i32
    %7 = arith.extui %6 : i1 to i32
    %c0_i32_1 = arith.constant 0 : i32
    %8 = arith.cmpi ne, %7, %c0_i32_1 : i32
    scf.if %8 {
      %c0 = arith.constant 0 : index
      %c0_4 = arith.constant 0 : index
      %12 = vector.load %arg9[%c0, %c0_4] : memref<128x512xf32, #tpu.memory_space<vmem>>, vector<128x512xf32>
      %c0_5 = arith.constant 0 : index
      %c0_6 = arith.constant 0 : index
      %13 = vector.load %arg7[%c0_5, %c0_6] : memref<8x128xf32, #tpu.memory_space<vmem>>, vector<8x128xf32>
      %c0_7 = arith.constant 0 : index
      %c0_8 = arith.constant 0 : index
      %14 = vector.load %arg8[%c0_7, %c0_8] : memref<8x128xf32, #tpu.memory_space<vmem>>, vector<8x128xf32>
      %c0_9 = arith.constant 0 : index
      %c0_10 = arith.constant 0 : index
      %15 = vector.load %arg3[%c0_9, %c0_10] : memref<8x128xi32, #tpu.memory_space<vmem>>, vector<8x128xi32>
      %16 = vector.extract_strided_slice %15 {offsets = [0, 0], sizes = [8, 1], strides = [1, 1]} : vector<8x128xi32> to vector<8x1xi32>
      %17 = vector.shape_cast %16 : vector<8x1xi32> to vector<8x1xi32>
      %18 = vector.broadcast %17 : vector<8x1xi32> to vector<8x128xi32>
      %c0_i32_11 = arith.constant 0 : i32
      %19 = arith.index_cast %c0_i32_11 : i32 to index
      %c0_12 = arith.constant 0 : index
      %c0_13 = arith.constant 0 : index
      %20 = vector.load %arg4[%19, %c0_12, %c0_13] : memref<8x8x512xf32, #tpu.memory_space<vmem>>, vector<1x8x512xf32>
      %21 = vector.shape_cast %20 : vector<1x8x512xf32> to vector<8x512xf32>
      %cst = arith.constant dense<0.000000e+00> : vector<8x512xf32>
      %22 = tpu.matmul %13, %12, %cst {dimension_numbers = #tpu.dot_dimension_numbers<[1], [0], [0], [1], [0, 0, 1, 1], [], []>} : vector<8x128xf32>, vector<128x512xf32>, vector<8x512xf32> -> vector<8x512xf32>
      %23 = arith.addf %22, %21 : vector<8x512xf32>
      %24 = vector.extract_strided_slice %23 {offsets = [0, 0], sizes = [8, 128], strides = [1, 1]} : vector<8x512xf32> to vector<8x128xf32>
      %25 = arith.negf %24 : vector<8x128xf32>
      %26 = math.exp %25 : vector<8x128xf32>
      %cst_14 = arith.constant 1.000000e+00 : f32
      %27 = vector.broadcast %cst_14 : f32 to vector<8x128xf32>
      %28 = arith.addf %27, %26 : vector<8x128xf32>
      %29 = arith.divf %27, %28 : vector<8x128xf32>
      %30 = vector.extract_strided_slice %23 {offsets = [0, 128], sizes = [8, 128], strides = [1, 1]} : vector<8x512xf32> to vector<8x128xf32>
      %31 = arith.negf %30 : vector<8x128xf32>
      %32 = math.exp %31 : vector<8x128xf32>
      %cst_15 = arith.constant 1.000000e+00 : f32
      %33 = vector.broadcast %cst_15 : f32 to vector<8x128xf32>
      %34 = arith.addf %33, %32 : vector<8x128xf32>
      %35 = arith.divf %33, %34 : vector<8x128xf32>
      %36 = vector.extract_strided_slice %23 {offsets = [0, 256], sizes = [8, 128], strides = [1, 1]} : vector<8x512xf32> to vector<8x128xf32>
      %37 = math.tanh %36 : vector<8x128xf32>
      %38 = vector.extract_strided_slice %23 {offsets = [0, 384], sizes = [8, 128], strides = [1, 1]} : vector<8x512xf32> to vector<8x128xf32>
      %39 = arith.negf %38 : vector<8x128xf32>
      %40 = math.exp %39 : vector<8x128xf32>
      %cst_16 = arith.constant 1.000000e+00 : f32
      %41 = vector.broadcast %cst_16 : f32 to vector<8x128xf32>
      %42 = arith.addf %41, %40 : vector<8x128xf32>
      %43 = arith.divf %41, %42 : vector<8x128xf32>
      %44 = arith.mulf %35, %14 : vector<8x128xf32>
      %45 = arith.mulf %29, %37 : vector<8x128xf32>
      %46 = arith.addf %44, %45 : vector<8x128xf32>
      %47 = math.tanh %46 : vector<8x128xf32>
      %48 = arith.mulf %43, %47 : vector<8x128xf32>
      %49 = arith.addi %0, %c0_i32_11 : i32
      %50 = vector.broadcast %49 : i32 to vector<8x128xi32>
      %51 = arith.cmpi slt, %50, %18 : vector<8x128xi32>
      %52 = arith.select %51, %48, %13 : vector<8x128xi1>, vector<8x128xf32>
      %53 = arith.select %51, %46, %14 : vector<8x128xi1>, vector<8x128xf32>
      %c1_i32 = arith.constant 1 : i32
      %54 = arith.index_cast %c1_i32 : i32 to index
      %c0_17 = arith.constant 0 : index
      %c0_18 = arith.constant 0 : index
      %55 = vector.load %arg4[%54, %c0_17, %c0_18] : memref<8x8x512xf32, #tpu.memory_space<vmem>>, vector<1x8x512xf32>
      %56 = vector.shape_cast %55 : vector<1x8x512xf32> to vector<8x512xf32>
      %cst_19 = arith.constant dense<0.000000e+00> : vector<8x512xf32>
      %57 = tpu.matmul %52, %12, %cst_19 {dimension_numbers = #tpu.dot_dimension_numbers<[1], [0], [0], [1], [0, 0, 1, 1], [], []>} : vector<8x128xf32>, vector<128x512xf32>, vector<8x512xf32> -> vector<8x512xf32>
      %58 = arith.addf %57, %56 : vector<8x512xf32>
      %59 = vector.extract_strided_slice %58 {offsets = [0, 0], sizes = [8, 128], strides = [1, 1]} : vector<8x512xf32> to vector<8x128xf32>
      %60 = arith.negf %59 : vector<8x128xf32>
      %61 = math.exp %60 : vector<8x128xf32>
      %cst_20 = arith.constant 1.000000e+00 : f32
      %62 = vector.broadcast %cst_20 : f32 to vector<8x128xf32>
      %63 = arith.addf %62, %61 : vector<8x128xf32>
      %64 = arith.divf %62, %63 : vector<8x128xf32>
      %65 = vector.extract_strided_slice %58 {offsets = [0, 128], sizes = [8, 128], strides = [1, 1]} : vector<8x512xf32> to vector<8x128xf32>
      %66 = arith.negf %65 : vector<8x128xf32>
      %67 = math.exp %66 : vector<8x128xf32>
      %cst_21 = arith.constant 1.000000e+00 : f32
      %68 = vector.broadcast %cst_21 : f32 to vector<8x128xf32>
      %69 = arith.addf %68, %67 : vector<8x128xf32>
      %70 = arith.divf %68, %69 : vector<8x128xf32>
      %71 = vector.extract_strided_slice %58 {offsets = [0, 256], sizes = [8, 128], strides = [1, 1]} : vector<8x512xf32> to vector<8x128xf32>
      %72 = math.tanh %71 : vector<8x128xf32>
      %73 = vector.extract_strided_slice %58 {offsets = [0, 384], sizes = [8, 128], strides = [1, 1]} : vector<8x512xf32> to vector<8x128xf32>
      %74 = arith.negf %73 : vector<8x128xf32>
      %75 = math.exp %74 : vector<8x128xf32>
      %cst_22 = arith.constant 1.000000e+00 : f32
      %76 = vector.broadcast %cst_22 : f32 to vector<8x128xf32>
      %77 = arith.addf %76, %75 : vector<8x128xf32>
      %78 = arith.divf %76, %77 : vector<8x128xf32>
      %79 = arith.mulf %70, %53 : vector<8x128xf32>
      %80 = arith.mulf %64, %72 : vector<8x128xf32>
      %81 = arith.addf %79, %80 : vector<8x128xf32>
      %82 = math.tanh %81 : vector<8x128xf32>
      %83 = arith.mulf %78, %82 : vector<8x128xf32>
      %84 = arith.addi %0, %c1_i32 : i32
      %85 = vector.broadcast %84 : i32 to vector<8x128xi32>
      %86 = arith.cmpi slt, %85, %18 : vector<8x128xi32>
      %87 = arith.select %86, %83, %52 : vector<8x128xi1>, vector<8x128xf32>
      %88 = arith.select %86, %81, %53 : vector<8x128xi1>, vector<8x128xf32>
      %c2_i32 = arith.constant 2 : i32
      %89 = arith.index_cast %c2_i32 : i32 to index
      %c0_23 = arith.constant 0 : index
      %c0_24 = arith.constant 0 : index
      %90 = vector.load %arg4[%89, %c0_23, %c0_24] : memref<8x8x512xf32, #tpu.memory_space<vmem>>, vector<1x8x512xf32>
      %91 = vector.shape_cast %90 : vector<1x8x512xf32> to vector<8x512xf32>
      %cst_25 = arith.constant dense<0.000000e+00> : vector<8x512xf32>
      %92 = tpu.matmul %87, %12, %cst_25 {dimension_numbers = #tpu.dot_dimension_numbers<[1], [0], [0], [1], [0, 0, 1, 1], [], []>} : vector<8x128xf32>, vector<128x512xf32>, vector<8x512xf32> -> vector<8x512xf32>
      %93 = arith.addf %92, %91 : vector<8x512xf32>
      %94 = vector.extract_strided_slice %93 {offsets = [0, 0], sizes = [8, 128], strides = [1, 1]} : vector<8x512xf32> to vector<8x128xf32>
      %95 = arith.negf %94 : vector<8x128xf32>
      %96 = math.exp %95 : vector<8x128xf32>
      %cst_26 = arith.constant 1.000000e+00 : f32
      %97 = vector.broadcast %cst_26 : f32 to vector<8x128xf32>
      %98 = arith.addf %97, %96 : vector<8x128xf32>
      %99 = arith.divf %97, %98 : vector<8x128xf32>
      %100 = vector.extract_strided_slice %93 {offsets = [0, 128], sizes = [8, 128], strides = [1, 1]} : vector<8x512xf32> to vector<8x128xf32>
      %101 = arith.negf %100 : vector<8x128xf32>
      %102 = math.exp %101 : vector<8x128xf32>
      %cst_27 = arith.constant 1.000000e+00 : f32
      %103 = vector.broadcast %cst_27 : f32 to vector<8x128xf32>
      %104 = arith.addf %103, %102 : vector<8x128xf32>
      %105 = arith.divf %103, %104 : vector<8x128xf32>
      %106 = vector.extract_strided_slice %93 {offsets = [0, 256], sizes = [8, 128], strides = [1, 1]} : vector<8x512xf32> to vector<8x128xf32>
      %107 = math.tanh %106 : vector<8x128xf32>
      %108 = vector.extract_strided_slice %93 {offsets = [0, 384], sizes = [8, 128], strides = [1, 1]} : vector<8x512xf32> to vector<8x128xf32>
      %109 = arith.negf %108 : vector<8x128xf32>
      %110 = math.exp %109 : vector<8x128xf32>
      %cst_28 = arith.constant 1.000000e+00 : f32
      %111 = vector.broadcast %cst_28 : f32 to vector<8x128xf32>
      %112 = arith.addf %111, %110 : vector<8x128xf32>
      %113 = arith.divf %111, %112 : vector<8x128xf32>
      %114 = arith.mulf %105, %88 : vector<8x128xf32>
      %115 = arith.mulf %99, %107 : vector<8x128xf32>
      %116 = arith.addf %114, %115 : vector<8x128xf32>
      %117 = math.tanh %116 : vector<8x128xf32>
      %118 = arith.mulf %113, %117 : vector<8x128xf32>
      %119 = arith.addi %0, %c2_i32 : i32
      %120 = vector.broadcast %119 : i32 to vector<8x128xi32>
      %121 = arith.cmpi slt, %120, %18 : vector<8x128xi32>
      %122 = arith.select %121, %118, %87 : vector<8x128xi1>, vector<8x128xf32>
      %123 = arith.select %121, %116, %88 : vector<8x128xi1>, vector<8x128xf32>
      %c3_i32 = arith.constant 3 : i32
      %124 = arith.index_cast %c3_i32 : i32 to index
      %c0_29 = arith.constant 0 : index
      %c0_30 = arith.constant 0 : index
      %125 = vector.load %arg4[%124, %c0_29, %c0_30] : memref<8x8x512xf32, #tpu.memory_space<vmem>>, vector<1x8x512xf32>
      %126 = vector.shape_cast %125 : vector<1x8x512xf32> to vector<8x512xf32>
      %cst_31 = arith.constant dense<0.000000e+00> : vector<8x512xf32>
      %127 = tpu.matmul %122, %12, %cst_31 {dimension_numbers = #tpu.dot_dimension_numbers<[1], [0], [0], [1], [0, 0, 1, 1], [], []>} : vector<8x128xf32>, vector<128x512xf32>, vector<8x512xf32> -> vector<8x512xf32>
      %128 = arith.addf %127, %126 : vector<8x512xf32>
      %129 = vector.extract_strided_slice %128 {offsets = [0, 0], sizes = [8, 128], strides = [1, 1]} : vector<8x512xf32> to vector<8x128xf32>
      %130 = arith.negf %129 : vector<8x128xf32>
      %131 = math.exp %130 : vector<8x128xf32>
      %cst_32 = arith.constant 1.000000e+00 : f32
      %132 = vector.broadcast %cst_32 : f32 to vector<8x128xf32>
      %133 = arith.addf %132, %131 : vector<8x128xf32>
      %134 = arith.divf %132, %133 : vector<8x128xf32>
      %135 = vector.extract_strided_slice %128 {offsets = [0, 128], sizes = [8, 128], strides = [1, 1]} : vector<8x512xf32> to vector<8x128xf32>
      %136 = arith.negf %135 : vector<8x128xf32>
      %137 = math.exp %136 : vector<8x128xf32>
      %cst_33 = arith.constant 1.000000e+00 : f32
      %138 = vector.broadcast %cst_33 : f32 to vector<8x128xf32>
      %139 = arith.addf %138, %137 : vector<8x128xf32>
      %140 = arith.divf %138, %139 : vector<8x128xf32>
      %141 = vector.extract_strided_slice %128 {offsets = [0, 256], sizes = [8, 128], strides = [1, 1]} : vector<8x512xf32> to vector<8x128xf32>
      %142 = math.tanh %141 : vector<8x128xf32>
      %143 = vector.extract_strided_slice %128 {offsets = [0, 384], sizes = [8, 128], strides = [1, 1]} : vector<8x512xf32> to vector<8x128xf32>
      %144 = arith.negf %143 : vector<8x128xf32>
      %145 = math.exp %144 : vector<8x128xf32>
      %cst_34 = arith.constant 1.000000e+00 : f32
      %146 = vector.broadcast %cst_34 : f32 to vector<8x128xf32>
      %147 = arith.addf %146, %145 : vector<8x128xf32>
      %148 = arith.divf %146, %147 : vector<8x128xf32>
      %149 = arith.mulf %140, %123 : vector<8x128xf32>
      %150 = arith.mulf %134, %142 : vector<8x128xf32>
      %151 = arith.addf %149, %150 : vector<8x128xf32>
      %152 = math.tanh %151 : vector<8x128xf32>
      %153 = arith.mulf %148, %152 : vector<8x128xf32>
      %154 = arith.addi %0, %c3_i32 : i32
      %155 = vector.broadcast %154 : i32 to vector<8x128xi32>
      %156 = arith.cmpi slt, %155, %18 : vector<8x128xi32>
      %157 = arith.select %156, %153, %122 : vector<8x128xi1>, vector<8x128xf32>
      %158 = arith.select %156, %151, %123 : vector<8x128xi1>, vector<8x128xf32>
      %c4_i32 = arith.constant 4 : i32
      %159 = arith.index_cast %c4_i32 : i32 to index
      %c0_35 = arith.constant 0 : index
      %c0_36 = arith.constant 0 : index
      %160 = vector.load %arg4[%159, %c0_35, %c0_36] : memref<8x8x512xf32, #tpu.memory_space<vmem>>, vector<1x8x512xf32>
      %161 = vector.shape_cast %160 : vector<1x8x512xf32> to vector<8x512xf32>
      %cst_37 = arith.constant dense<0.000000e+00> : vector<8x512xf32>
      %162 = tpu.matmul %157, %12, %cst_37 {dimension_numbers = #tpu.dot_dimension_numbers<[1], [0], [0], [1], [0, 0, 1, 1], [], []>} : vector<8x128xf32>, vector<128x512xf32>, vector<8x512xf32> -> vector<8x512xf32>
      %163 = arith.addf %162, %161 : vector<8x512xf32>
      %164 = vector.extract_strided_slice %163 {offsets = [0, 0], sizes = [8, 128], strides = [1, 1]} : vector<8x512xf32> to vector<8x128xf32>
      %165 = arith.negf %164 : vector<8x128xf32>
      %166 = math.exp %165 : vector<8x128xf32>
      %cst_38 = arith.constant 1.000000e+00 : f32
      %167 = vector.broadcast %cst_38 : f32 to vector<8x128xf32>
      %168 = arith.addf %167, %166 : vector<8x128xf32>
      %169 = arith.divf %167, %168 : vector<8x128xf32>
      %170 = vector.extract_strided_slice %163 {offsets = [0, 128], sizes = [8, 128], strides = [1, 1]} : vector<8x512xf32> to vector<8x128xf32>
      %171 = arith.negf %170 : vector<8x128xf32>
      %172 = math.exp %171 : vector<8x128xf32>
      %cst_39 = arith.constant 1.000000e+00 : f32
      %173 = vector.broadcast %cst_39 : f32 to vector<8x128xf32>
      %174 = arith.addf %173, %172 : vector<8x128xf32>
      %175 = arith.divf %173, %174 : vector<8x128xf32>
      %176 = vector.extract_strided_slice %163 {offsets = [0, 256], sizes = [8, 128], strides = [1, 1]} : vector<8x512xf32> to vector<8x128xf32>
      %177 = math.tanh %176 : vector<8x128xf32>
      %178 = vector.extract_strided_slice %163 {offsets = [0, 384], sizes = [8, 128], strides = [1, 1]} : vector<8x512xf32> to vector<8x128xf32>
      %179 = arith.negf %178 : vector<8x128xf32>
      %180 = math.exp %179 : vector<8x128xf32>
      %cst_40 = arith.constant 1.000000e+00 : f32
      %181 = vector.broadcast %cst_40 : f32 to vector<8x128xf32>
      %182 = arith.addf %181, %180 : vector<8x128xf32>
      %183 = arith.divf %181, %182 : vector<8x128xf32>
      %184 = arith.mulf %175, %158 : vector<8x128xf32>
      %185 = arith.mulf %169, %177 : vector<8x128xf32>
      %186 = arith.addf %184, %185 : vector<8x128xf32>
      %187 = math.tanh %186 : vector<8x128xf32>
      %188 = arith.mulf %183, %187 : vector<8x128xf32>
      %189 = arith.addi %0, %c4_i32 : i32
      %190 = vector.broadcast %189 : i32 to vector<8x128xi32>
      %191 = arith.cmpi slt, %190, %18 : vector<8x128xi32>
      %192 = arith.select %191, %188, %157 : vector<8x128xi1>, vector<8x128xf32>
      %193 = arith.select %191, %186, %158 : vector<8x128xi1>, vector<8x128xf32>
      %c5_i32 = arith.constant 5 : i32
      %194 = arith.index_cast %c5_i32 : i32 to index
      %c0_41 = arith.constant 0 : index
      %c0_42 = arith.constant 0 : index
      %195 = vector.load %arg4[%194, %c0_41, %c0_42] : memref<8x8x512xf32, #tpu.memory_space<vmem>>, vector<1x8x512xf32>
      %196 = vector.shape_cast %195 : vector<1x8x512xf32> to vector<8x512xf32>
      %cst_43 = arith.constant dense<0.000000e+00> : vector<8x512xf32>
      %197 = tpu.matmul %192, %12, %cst_43 {dimension_numbers = #tpu.dot_dimension_numbers<[1], [0], [0], [1], [0, 0, 1, 1], [], []>} : vector<8x128xf32>, vector<128x512xf32>, vector<8x512xf32> -> vector<8x512xf32>
      %198 = arith.addf %197, %196 : vector<8x512xf32>
      %199 = vector.extract_strided_slice %198 {offsets = [0, 0], sizes = [8, 128], strides = [1, 1]} : vector<8x512xf32> to vector<8x128xf32>
      %200 = arith.negf %199 : vector<8x128xf32>
      %201 = math.exp %200 : vector<8x128xf32>
      %cst_44 = arith.constant 1.000000e+00 : f32
      %202 = vector.broadcast %cst_44 : f32 to vector<8x128xf32>
      %203 = arith.addf %202, %201 : vector<8x128xf32>
      %204 = arith.divf %202, %203 : vector<8x128xf32>
      %205 = vector.extract_strided_slice %198 {offsets = [0, 128], sizes = [8, 128], strides = [1, 1]} : vector<8x512xf32> to vector<8x128xf32>
      %206 = arith.negf %205 : vector<8x128xf32>
      %207 = math.exp %206 : vector<8x128xf32>
      %cst_45 = arith.constant 1.000000e+00 : f32
      %208 = vector.broadcast %cst_45 : f32 to vector<8x128xf32>
      %209 = arith.addf %208, %207 : vector<8x128xf32>
      %210 = arith.divf %208, %209 : vector<8x128xf32>
      %211 = vector.extract_strided_slice %198 {offsets = [0, 256], sizes = [8, 128], strides = [1, 1]} : vector<8x512xf32> to vector<8x128xf32>
      %212 = math.tanh %211 : vector<8x128xf32>
      %213 = vector.extract_strided_slice %198 {offsets = [0, 384], sizes = [8, 128], strides = [1, 1]} : vector<8x512xf32> to vector<8x128xf32>
      %214 = arith.negf %213 : vector<8x128xf32>
      %215 = math.exp %214 : vector<8x128xf32>
      %cst_46 = arith.constant 1.000000e+00 : f32
      %216 = vector.broadcast %cst_46 : f32 to vector<8x128xf32>
      %217 = arith.addf %216, %215 : vector<8x128xf32>
      %218 = arith.divf %216, %217 : vector<8x128xf32>
      %219 = arith.mulf %210, %193 : vector<8x128xf32>
      %220 = arith.mulf %204, %212 : vector<8x128xf32>
      %221 = arith.addf %219, %220 : vector<8x128xf32>
      %222 = math.tanh %221 : vector<8x128xf32>
      %223 = arith.mulf %218, %222 : vector<8x128xf32>
      %224 = arith.addi %0, %c5_i32 : i32
      %225 = vector.broadcast %224 : i32 to vector<8x128xi32>
      %226 = arith.cmpi slt, %225, %18 : vector<8x128xi32>
      %227 = arith.select %226, %223, %192 : vector<8x128xi1>, vector<8x128xf32>
      %228 = arith.select %226, %221, %193 : vector<8x128xi1>, vector<8x128xf32>
      %c6_i32 = arith.constant 6 : i32
      %229 = arith.index_cast %c6_i32 : i32 to index
      %c0_47 = arith.constant 0 : index
      %c0_48 = arith.constant 0 : index
      %230 = vector.load %arg4[%229, %c0_47, %c0_48] : memref<8x8x512xf32, #tpu.memory_space<vmem>>, vector<1x8x512xf32>
      %231 = vector.shape_cast %230 : vector<1x8x512xf32> to vector<8x512xf32>
      %cst_49 = arith.constant dense<0.000000e+00> : vector<8x512xf32>
      %232 = tpu.matmul %227, %12, %cst_49 {dimension_numbers = #tpu.dot_dimension_numbers<[1], [0], [0], [1], [0, 0, 1, 1], [], []>} : vector<8x128xf32>, vector<128x512xf32>, vector<8x512xf32> -> vector<8x512xf32>
      %233 = arith.addf %232, %231 : vector<8x512xf32>
      %234 = vector.extract_strided_slice %233 {offsets = [0, 0], sizes = [8, 128], strides = [1, 1]} : vector<8x512xf32> to vector<8x128xf32>
      %235 = arith.negf %234 : vector<8x128xf32>
      %236 = math.exp %235 : vector<8x128xf32>
      %cst_50 = arith.constant 1.000000e+00 : f32
      %237 = vector.broadcast %cst_50 : f32 to vector<8x128xf32>
      %238 = arith.addf %237, %236 : vector<8x128xf32>
      %239 = arith.divf %237, %238 : vector<8x128xf32>
      %240 = vector.extract_strided_slice %233 {offsets = [0, 128], sizes = [8, 128], strides = [1, 1]} : vector<8x512xf32> to vector<8x128xf32>
      %241 = arith.negf %240 : vector<8x128xf32>
      %242 = math.exp %241 : vector<8x128xf32>
      %cst_51 = arith.constant 1.000000e+00 : f32
      %243 = vector.broadcast %cst_51 : f32 to vector<8x128xf32>
      %244 = arith.addf %243, %242 : vector<8x128xf32>
      %245 = arith.divf %243, %244 : vector<8x128xf32>
      %246 = vector.extract_strided_slice %233 {offsets = [0, 256], sizes = [8, 128], strides = [1, 1]} : vector<8x512xf32> to vector<8x128xf32>
      %247 = math.tanh %246 : vector<8x128xf32>
      %248 = vector.extract_strided_slice %233 {offsets = [0, 384], sizes = [8, 128], strides = [1, 1]} : vector<8x512xf32> to vector<8x128xf32>
      %249 = arith.negf %248 : vector<8x128xf32>
      %250 = math.exp %249 : vector<8x128xf32>
      %cst_52 = arith.constant 1.000000e+00 : f32
      %251 = vector.broadcast %cst_52 : f32 to vector<8x128xf32>
      %252 = arith.addf %251, %250 : vector<8x128xf32>
      %253 = arith.divf %251, %252 : vector<8x128xf32>
      %254 = arith.mulf %245, %228 : vector<8x128xf32>
      %255 = arith.mulf %239, %247 : vector<8x128xf32>
      %256 = arith.addf %254, %255 : vector<8x128xf32>
      %257 = math.tanh %256 : vector<8x128xf32>
      %258 = arith.mulf %253, %257 : vector<8x128xf32>
      %259 = arith.addi %0, %c6_i32 : i32
      %260 = vector.broadcast %259 : i32 to vector<8x128xi32>
      %261 = arith.cmpi slt, %260, %18 : vector<8x128xi32>
      %262 = arith.select %261, %258, %227 : vector<8x128xi1>, vector<8x128xf32>
      %263 = arith.select %261, %256, %228 : vector<8x128xi1>, vector<8x128xf32>
      %c7_i32 = arith.constant 7 : i32
      %264 = arith.index_cast %c7_i32 : i32 to index
      %c0_53 = arith.constant 0 : index
      %c0_54 = arith.constant 0 : index
      %265 = vector.load %arg4[%264, %c0_53, %c0_54] : memref<8x8x512xf32, #tpu.memory_space<vmem>>, vector<1x8x512xf32>
      %266 = vector.shape_cast %265 : vector<1x8x512xf32> to vector<8x512xf32>
      %cst_55 = arith.constant dense<0.000000e+00> : vector<8x512xf32>
      %267 = tpu.matmul %262, %12, %cst_55 {dimension_numbers = #tpu.dot_dimension_numbers<[1], [0], [0], [1], [0, 0, 1, 1], [], []>} : vector<8x128xf32>, vector<128x512xf32>, vector<8x512xf32> -> vector<8x512xf32>
      %268 = arith.addf %267, %266 : vector<8x512xf32>
      %269 = vector.extract_strided_slice %268 {offsets = [0, 0], sizes = [8, 128], strides = [1, 1]} : vector<8x512xf32> to vector<8x128xf32>
      %270 = arith.negf %269 : vector<8x128xf32>
      %271 = math.exp %270 : vector<8x128xf32>
      %cst_56 = arith.constant 1.000000e+00 : f32
      %272 = vector.broadcast %cst_56 : f32 to vector<8x128xf32>
      %273 = arith.addf %272, %271 : vector<8x128xf32>
      %274 = arith.divf %272, %273 : vector<8x128xf32>
      %275 = vector.extract_strided_slice %268 {offsets = [0, 128], sizes = [8, 128], strides = [1, 1]} : vector<8x512xf32> to vector<8x128xf32>
      %276 = arith.negf %275 : vector<8x128xf32>
      %277 = math.exp %276 : vector<8x128xf32>
      %cst_57 = arith.constant 1.000000e+00 : f32
      %278 = vector.broadcast %cst_57 : f32 to vector<8x128xf32>
      %279 = arith.addf %278, %277 : vector<8x128xf32>
      %280 = arith.divf %278, %279 : vector<8x128xf32>
      %281 = vector.extract_strided_slice %268 {offsets = [0, 256], sizes = [8, 128], strides = [1, 1]} : vector<8x512xf32> to vector<8x128xf32>
      %282 = math.tanh %281 : vector<8x128xf32>
      %283 = vector.extract_strided_slice %268 {offsets = [0, 384], sizes = [8, 128], strides = [1, 1]} : vector<8x512xf32> to vector<8x128xf32>
      %284 = arith.negf %283 : vector<8x128xf32>
      %285 = math.exp %284 : vector<8x128xf32>
      %cst_58 = arith.constant 1.000000e+00 : f32
      %286 = vector.broadcast %cst_58 : f32 to vector<8x128xf32>
      %287 = arith.addf %286, %285 : vector<8x128xf32>
      %288 = arith.divf %286, %287 : vector<8x128xf32>
      %289 = arith.mulf %280, %263 : vector<8x128xf32>
      %290 = arith.mulf %274, %282 : vector<8x128xf32>
      %291 = arith.addf %289, %290 : vector<8x128xf32>
      %292 = math.tanh %291 : vector<8x128xf32>
      %293 = arith.mulf %288, %292 : vector<8x128xf32>
      %294 = arith.addi %0, %c7_i32 : i32
      %295 = vector.broadcast %294 : i32 to vector<8x128xi32>
      %296 = arith.cmpi slt, %295, %18 : vector<8x128xi32>
      %297 = arith.select %296, %293, %262 : vector<8x128xi1>, vector<8x128xf32>
      %298 = arith.select %296, %291, %263 : vector<8x128xi1>, vector<8x128xf32>
      %c8_i32_59 = arith.constant 8 : i32
      %c0_60 = arith.constant 0 : index
      %c0_61 = arith.constant 0 : index
      %299 = vector.load %arg7[%c0_60, %c0_61] : memref<8x128xf32, #tpu.memory_space<vmem>>, vector<8x128xf32>
      tpu.vector_store %arg7[%c0_60, %c0_61], %297 {strides = array<i32>} : memref<8x128xf32, #tpu.memory_space<vmem>>, vector<8x128xf32>,
      %c0_62 = arith.constant 0 : index
      %c0_63 = arith.constant 0 : index
      %300 = vector.load %arg8[%c0_62, %c0_63] : memref<8x128xf32, #tpu.memory_space<vmem>>, vector<8x128xf32>
      tpu.vector_store %arg8[%c0_62, %c0_63], %298 {strides = array<i32>} : memref<8x128xf32, #tpu.memory_space<vmem>>, vector<8x128xf32>,
    } else {
    }
    %c0_i32_2 = arith.constant 0 : i32
    %9 = arith.cmpi eq, %arg1, %c0_i32_2 : i32
    %10 = arith.extui %9 : i1 to i32
    %c0_i32_3 = arith.constant 0 : i32
    %11 = arith.cmpi ne, %10, %c0_i32_3 : i32
    scf.if %11 {
      %c0 = arith.constant 0 : index
      %c0_4 = arith.constant 0 : index
      %12 = vector.load %arg7[%c0, %c0_4] : memref<8x128xf32, #tpu.memory_space<vmem>>, vector<8x128xf32>
      %c0_5 = arith.constant 0 : index
      %c0_6 = arith.constant 0 : index
      %13 = vector.load %arg6[%c0_5, %c0_6] : memref<8x128xf32, #tpu.memory_space<vmem>>, vector<8x128xf32>
      tpu.vector_store %arg6[%c0_5, %c0_6], %12 {strides = array<i32>} : memref<8x128xf32, #tpu.memory_space<vmem>>, vector<8x128xf32>,
    } else {
    }
    return
  }
  func.func @transform_0(%arg0: i32, %arg1: i32, %arg2: memref<1xi32, #tpu.memory_space<smem>>) -> (i32, i32) {
    %c0_i32 = arith.constant 0 : i32
    %c0_i32_0 = arith.constant 0 : i32
    return %arg0, %c0_i32 : i32, i32
  }
  func.func @transform_1(%arg0: i32, %arg1: i32, %arg2: memref<1xi32, #tpu.memory_space<smem>>) -> (i32, i32, i32) {
    %c0_i32 = arith.constant 0 : i32
    %c0_i32_0 = arith.constant 0 : i32
    return %arg1, %arg0, %c0_i32 : i32, i32, i32
  }
  func.func @transform_3(%arg0: i32, %arg1: i32, %arg2: memref<1xi32, #tpu.memory_space<smem>>) -> (i32, i32) {
    %c0_i32 = arith.constant 0 : i32
    %c0_i32_0 = arith.constant 0 : i32
    return %arg0, %c0_i32 : i32, i32
  }
}

</mosaic_0001>

<llo_original>
// kernel: tpu_custom_call.1
$region0: #{tpu_custom_call.1}
  #allocation0 [shape = 'u32[]', space=smem, size = 0x4, offset = 0x4, fixed_abs, tag = 'smem constant byte address 0x4 - core index']
  #allocation1 [shape = 'u32[144,128]{1,0:T(1,128)}', space=vmem, size = 0x12000, scoped, tag = 'internal scratch']
  #allocation2 [shape = 'f32[8,128]{1,0:T(8,128)}', space=vmem, size = 0x1000, scoped, tag = 'scratch operand']
  #allocation3 [shape = 'f32[8,128]{1,0:T(8,128)}', space=vmem, size = 0x1000, scoped, tag = 'scratch operand']
  #allocation4 [shape = 'f32[128,512]{1,0:T(8,128)}', space=vmem, size = 0x40000, scoped, tag = 'scratch operand']
  #allocation5 [shape = 's32[1]{0}', space=sflag, size = 0x4, scoped, tag = 'scratch operand']
  #allocation6 [shape = 's32[1]{0}', space=sflag, size = 0x4, scoped, tag = 'scoped memory for tpu_custom_call.1']
  #allocation7 [shape = 's32[1]{0:T(128)S(6)}', space=smem, size = 0x200, scoped, tag = 'prefetched SMEM operand 0']
  #allocation14 [shape = 's32[]', space=sflag, size = 0x4, offset = 0, fixed_abs, tag = 'sflag constant byte address 0x0 - dummy sync flag']
  #allocation15 [shape = 's32[]', space=sflag, size = 0x4, offset = 0, fixed_abs, tag = 'sflag constant byte address 0x0 - dummy sync flag']
  #allocation16 [shape = 'u32[]', space=smem, size = 0x4, offset = 0x44, fixed_abs, tag = 'smem constant byte address 0x44 - assertion arg 0']
  #allocation17 [shape = 'u32[]', space=smem, size = 0x4, offset = 0x48, fixed_abs, tag = 'smem constant byte address 0x48 - assertion arg 1']
  %s0 = inlined_call_operand.<no memory space> [shape: s32[1], index: 0, kind: input, shape index: {}]
  %s1 = inlined_call_operand.hbm [shape: s32[8,128], index: 1, kind: input, shape index: {}]
  %s2 = inlined_call_operand.hbm [shape: f32[8,8,512], index: 2, kind: input, shape index: {}]
  %s3 = inlined_call_operand.hbm [shape: f32[128,512], index: 3, kind: input, shape index: {}]
  %s4 = inlined_call_operand.hbm [shape: f32[8,128], index: 4, kind: output, shape index: {}]
  %s5 = sld [smem:[#allocation0]]
  $region42: #{tpu_custom_call.1} parent=0
    _
  %s7 = ssub.s32 1, %s5
  %s8 = scalar_select 0, %s7, %s5
  %9 = sst [smem:[#allocation7]] %s0
  $region1: #{tpu_custom_call.1} parent=0
    #allocation8 [shape = 'u8[4096]{0}', space=vmem, size = 0x1000, scoped, tag = 'input window, operand 1, single buffered']
    #allocation9 [shape = 's32[1]{0}', space=sflag, size = 0x4, scoped, tag = 'scoped memory for tpu_custom_call.1']
    #allocation10 [shape = 's32[1]{0}', space=sflag, size = 0x4, scoped, tag = 'scoped memory for tpu_custom_call.1']
    #allocation11 [shape = 'u8[131072]{0}', space=vmem, size = 0x20000, scoped, tag = 'input window, operand 2, single buffered']
    #allocation12 [shape = 's32[1]{0}', space=sflag, size = 0x4, scoped, tag = 'scoped memory for tpu_custom_call.1']
    #allocation13 [shape = 'u8[4096]{0}', space=vmem, size = 0x1000, scoped, tag = 'output window, operand 0, single buffered']
    %10 = vsyncpa [#allocation9], 0
    %11 = vsyncpa [#allocation12], 0
    %12 = vsyncpa [#allocation10], 0
    // Predicated region
    $region2: #{tpu_custom_call.1} parent=1 // pred_check
      _
    $region3: #{tpu_custom_call.1} parent=1 // pred_check_branch
      %14 = sbr.rel (0) target = $region5
    $region4: #{tpu_custom_call.1} parent=1 // pred_region
      %s16 = ssub.s32 128, 128
      %17 = vsyncadd [#allocation9], %s16
      %s19 = sshll.u32 [#allocation8], 4
      %s20 = int_to_ptr.vmem [resolvable:$true] %s19
      %22 = dma.hbm_to_vmem [thread:$0]  %s1, 128, %s20, [#allocation9]
    $region5: #{tpu_custom_call.1} parent=1 // pred_fallthru
      _
    // Predicated region
    $region6: #{tpu_custom_call.1} parent=1 // pred_check
      _
    $region7: #{tpu_custom_call.1} parent=1 // pred_check_branch
      %24 = sbr.rel (0) target = $region9
    $region8: #{tpu_custom_call.1} parent=1 // pred_region
      %s26 = ssub.s32 4096, 4096
      %27 = vsyncadd [#allocation12], %s26
      %s28 = sshll.u32 [#allocation11], 4
      %s29 = int_to_ptr.vmem [resolvable:$true] %s28
      %34 = dma.hbm_to_vmem [thread:$0]  %s2, 4096, %s29, [#allocation12], 512, 512, 32
    $region9: #{tpu_custom_call.1} parent=1 // pred_fallthru
      _
    // Predicated region
    $region10: #{tpu_custom_call.1} parent=1 // pred_check
      _
    $region11: #{tpu_custom_call.1} parent=1 // pred_check_branch
      %36 = sbr.rel (0) target = $region13
    $region12: #{tpu_custom_call.1} parent=1 // pred_region
      %37 = dma.done [#allocation9], 128
    $region13: #{tpu_custom_call.1} parent=1 // pred_fallthru
      _
    // Predicated region
    $region14: #{tpu_custom_call.1} parent=1 // pred_check
      _
    $region15: #{tpu_custom_call.1} parent=1 // pred_check_branch
      %39 = sbr.rel (0) target = $region17
    $region16: #{tpu_custom_call.1} parent=1 // pred_region
      %40 = dma.done [#allocation12], 4096
    $region17: #{tpu_custom_call.1} parent=1 // pred_fallthru
      _
    %s41 = smul.u32 0, 8
    %p42 = scmp.eq.s32.totalorder 0, 0
    // Predicated region
    $region18: #{tpu_custom_call.1} parent=1 // pred_check
      %p43 = pneg %p42
    $region19: #{tpu_custom_call.1} parent=1 // pred_check_branch
      %45 = sbr.rel (%p43) target = $region21
    $region20: #{tpu_custom_call.1} parent=1 // pred_region
      %46 = vst [vmem:[#allocation2] sm:$0xff] 0.0
      %47 = vst [vmem:[#allocation3] sm:$0xff] 0.0
      // Predicated region
      $region22: #{tpu_custom_call.1} parent=20 // pred_check
        _
      $region23: #{tpu_custom_call.1} parent=20 // pred_check_branch
        %49 = sbr.rel target = $region25
      $region24: #{tpu_custom_call.1} parent=20 // pred_region
        %50 = sst [smem:[#allocation16]] [#allocation15]
        %51 = sst [smem:[#allocation17]] [#allocation14]
      $region25: #{tpu_custom_call.1} parent=20 // pred_fallthru
        _
      %53 = shalt.err (0)
      %s55 = sshll.u32 [#allocation4], 4
      %s56 = int_to_ptr.vmem [resolvable:$true] %s55
      %58 = dma.hbm_to_vmem [thread:$0]  %s3, 8192, %s56, [#allocation5]
      %s59 = smul.u32 8, 16
      %s60 = smul.u32 %s59, 4
      %s61 = sshll.u32 %s60, 4
      %62 = dma.done [#allocation5], %s61
    $region21: #{tpu_custom_call.1} parent=1 // pred_fallthru
      _
    %s63 = sld [smem:[#allocation7]]
    %p64 = scmp.lt.s32.totalorder %s41, %s63
    // Predicated region
    $region26: #{tpu_custom_call.1} parent=1 // pred_check
      %p65 = pneg %p64
    $region27: #{tpu_custom_call.1} parent=1 // pred_check_branch
      %67 = sbr.rel (%p65) target = $region29
    $region28: #{tpu_custom_call.1} parent=1 // pred_region
      %v68 = vld [vmem:[#allocation4] sm:$0xff]
      %v69 = vld [vmem:[#allocation4 + $0x8] sm:$0xff]
      %v70 = vld [vmem:[#allocation4 + $0x10] sm:$0xff]
      %v71 = vld [vmem:[#allocation4 + $0x18] sm:$0xff]
      %v72 = vld [vmem:[#allocation4 + $0x20] sm:$0xff]
      %v73 = vld [vmem:[#allocation4 + $0x28] sm:$0xff]
      %v74 = vld [vmem:[#allocation4 + $0x30] sm:$0xff]
      %v75 = vld [vmem:[#allocation4 + $0x38] sm:$0xff]
      %v76 = vld [vmem:[#allocation4 + $0x40] sm:$0xff]
      %v77 = vld [vmem:[#allocation4 + $0x48] sm:$0xff]
      %v78 = vld [vmem:[#allocation4 + $0x50] sm:$0xff]
      %v79 = vld [vmem:[#allocation4 + $0x58] sm:$0xff]
      %v80 = vld [vmem:[#allocation4 + $0x60] sm:$0xff]
      %v81 = vld [vmem:[#allocation4 + $0x68] sm:$0xff]
      %v82 = vld [vmem:[#allocation4 + $0x70] sm:$0xff]
      %v83 = vld [vmem:[#allocation4 + $0x78] sm:$0xff]
      %v84 = vld [vmem:[#allocation4 + $0x80] sm:$0xff]
      %v85 = vld [vmem:[#allocation4 + $0x88] sm:$0xff]
      %v86 = vld [vmem:[#allocation4 + $0x90] sm:$0xff]
      %v87 = vld [vmem:[#allocation4 + $0x98] sm:$0xff]
      %v88 = vld [vmem:[#allocation4 + $0xa0] sm:$0xff]
      %v89 = vld [vmem:[#allocation4 + $0xa8] sm:$0xff]
      %v90 = vld [vmem:[#allocation4 + $0xb0] sm:$0xff]
      %v91 = vld [vmem:[#allocation4 + $0xb8] sm:$0xff]
      %v92 = vld [vmem:[#allocation4 + $0xc0] sm:$0xff]
      %v93 = vld [vmem:[#allocation4 + $0xc8] sm:$0xff]
      %v94 = vld [vmem:[#allocation4 + $0xd0] sm:$0xff]
      %v95 = vld [vmem:[#allocation4 + $0xd8] sm:$0xff]
      %v96 = vld [vmem:[#allocation4 + $0xe0] sm:$0xff]
      %v97 = vld [vmem:[#allocation4 + $0xe8] sm:$0xff]
      %v98 = vld [vmem:[#allocation4 + $0xf0] sm:$0xff]
      %v99 = vld [vmem:[#allocation4 + $0xf8] sm:$0xff]
      %v100 = vld [vmem:[#allocation4 + $0x100] sm:$0xff]
      %v101 = vld [vmem:[#allocation4 + $0x108] sm:$0xff]
      %v102 = vld [vmem:[#allocation4 + $0x110] sm:$0xff]
      %v103 = vld [vmem:[#allocation4 + $0x118] sm:$0xff]
      %v104 = vld [vmem:[#allocation4 + $0x120] sm:$0xff]
      %v105 = vld [vmem:[#allocation4 + $0x128] sm:$0xff]
      %v106 = vld [vmem:[#allocation4 + $0x130] sm:$0xff]
      %v107 = vld [vmem:[#allocation4 + $0x138] sm:$0xff]
      %v108 = vld [vmem:[#allocation4 + $0x140] sm:$0xff]
      %v109 = vld [vmem:[#allocation4 + $0x148] sm:$0xff]
      %v110 = vld [vmem:[#allocation4 + $0x150] sm:$0xff]
      %v111 = vld [vmem:[#allocation4 + $0x158] sm:$0xff]
      %v112 = vld [vmem:[#allocation4 + $0x160] sm:$0xff]
      %v113 = vld [vmem:[#allocation4 + $0x168] sm:$0xff]
      %v114 = vld [vmem:[#allocation4 + $0x170] sm:$0xff]
      %v115 = vld [vmem:[#allocation4 + $0x178] sm:$0xff]
      %v116 = vld [vmem:[#allocation4 + $0x180] sm:$0xff]
      %v117 = vld [vmem:[#allocation4 + $0x188] sm:$0xff]
      %v118 = vld [vmem:[#allocation4 + $0x190] sm:$0xff]
      %v119 = vld [vmem:[#allocation4 + $0x198] sm:$0xff]
      %v120 = vld [vmem:[#allocation4 + $0x1a0] sm:$0xff]
      %v121 = vld [vmem:[#allocation4 + $0x1a8] sm:$0xff]
      %v122 = vld [vmem:[#allocation4 + $0x1b0] sm:$0xff]
      %v123 = vld [vmem:[#allocation4 + $0x1b8] sm:$0xff]
      %v124 = vld [vmem:[#allocation4 + $0x1c0] sm:$0xff]
      %v125 = vld [vmem:[#allocation4 + $0x1c8] sm:$0xff]
      %v126 = vld [vmem:[#allocation4 + $0x1d0] sm:$0xff]
      %v127 = vld [vmem:[#allocation4 + $0x1d8] sm:$0xff]
      %v128 = vld [vmem:[#allocation4 + $0x1e0] sm:$0xff]
      %v129 = vld [vmem:[#allocation4 + $0x1e8] sm:$0xff]
      %v130 = vld [vmem:[#allocation4 + $0x1f0] sm:$0xff]
      %v131 = vld [vmem:[#allocation4 + $0x1f8] sm:$0xff]
      %v132 = vld [vmem:[#allocation2] sm:$0xff]
      %v133 = vld [vmem:[#allocation3] sm:$0xff]
      %v134 = vld [vmem:[#allocation8] sm:$0xff]
      %135 = vset.pattern.permute.xlu0 0
      %136 = vperm.xlu0 %135, %v134
      %v137 = vpop.permute.xlu0 %136
      %v138 = vld [vmem:[#allocation11] sm:$0xff]
      %v139 = vld [vmem:[#allocation11 + $0x8] sm:$0xff]
      %v140 = vld [vmem:[#allocation11 + $0x10] sm:$0xff]
      %v141 = vld [vmem:[#allocation11 + $0x18] sm:$0xff]
      %142 = vmatprep.subr.mxu0 %v69
      %143 = vmatpush1.msra.mxu0 %v68
      %144 = vmatprep.subr.mxu0 %v73
      %145 = vmatpush1.msra.mxu0 %v72
      %146 = vmatprep.subr.mxu0 %v77
      %147 = vmatpush1.msra.mxu0 %v76
      %148 = vmatprep.subr.mxu0 %v81
      %149 = vmatpush1.msra.mxu0 %v80
      %150 = vmatprep.subr.mxu0 %v85
      %151 = vmatpush1.msra.mxu0 %v84
      %152 = vmatprep.subr.mxu0 %v89
      %153 = vmatpush1.msra.mxu0 %v88
      %154 = vmatprep.subr.mxu0 %v93
      %155 = vmatpush1.msra.mxu0 %v92
      %156 = vmatprep.subr.mxu0 %v97
      %157 = vmatpush1.msra.mxu0 %v96
      %158 = vmatprep.subr.mxu0 %v101
      %159 = vmatpush1.msra.mxu0 %v100
      %160 = vmatprep.subr.mxu0 %v105
      %161 = vmatpush1.msra.mxu0 %v104
      %162 = vmatprep.subr.mxu0 %v109
      %163 = vmatpush1.msra.mxu0 %v108
      %164 = vmatprep.subr.mxu0 %v113
      %165 = vmatpush1.msra.mxu0 %v112
      %166 = vmatprep.subr.mxu0 %v117
      %167 = vmatpush1.msra.mxu0 %v116
      %168 = vmatprep.subr.mxu0 %v121
      %169 = vmatpush1.msra.mxu0 %v120
      %170 = vmatprep.subr.mxu0 %v125
      %171 = vmatpush1.msra.mxu0 %v124
      %172 = vmatprep.subr.mxu0 %v129
      %173 = vmatpush1.msra.mxu0 %v128
      %174 = vmatprep.subr.mxu0 0.0
      %175 = vmatpush1.msra.mxu0 0.0
      %176 = vmatprep.subr.mxu0 0.0
      %177 = vmatpush1.msra.mxu0 0.0
      %178 = vmatprep.subr.mxu0 0.0
      %179 = vmatpush1.msra.mxu0 0.0
      %180 = vmatprep.subr.mxu0 0.0
      %181 = vmatpush1.msra.mxu0 0.0
      %182 = vmatprep.subr.mxu0 0.0
      %183 = vmatpush1.msra.mxu0 0.0
      %184 = vmatprep.subr.mxu0 0.0
      %185 = vmatpush1.msra.mxu0 0.0
      %186 = vmatprep.subr.mxu0 0.0
      %187 = vmatpush1.msra.mxu0 0.0
      %188 = vmatprep.subr.mxu0 0.0
      %189 = vmatpush1.msra.mxu0 0.0
      %190 = vmatprep.subr.mxu0 0.0
      %191 = vmatpush1.msra.mxu0 0.0
      %192 = vmatprep.subr.mxu0 0.0
      %193 = vmatpush1.msra.mxu0 0.0
      %194 = vmatprep.subr.mxu0 0.0
      %195 = vmatpush1.msra.mxu0 0.0
      %196 = vmatprep.subr.mxu0 0.0
      %197 = vmatpush1.msra.mxu0 0.0
      %198 = vmatprep.subr.mxu0 0.0
      %199 = vmatpush1.msra.mxu0 0.0
      %200 = vmatprep.subr.mxu0 0.0
      %201 = vmatpush1.msra.mxu0 0.0
      %202 = vmatprep.subr.mxu0 0.0
      %203 = vmatpush1.msra.mxu0 0.0
      %204 = vmatprep.subr.mxu0 0.0
      %205 = vmatpush1.msra.mxu0 0.0
      %206 = vmatprep.mubr.f32.mxu0 0.0
      %207 = vmatmul.mubr.f32.gmra.mrb[0].mxu0 %v132
      %v208 = vpop.f32.mrb[0].mxu0
      %v209 = vadd.f32 %v138, %v208
      %v210 = vpop.f32.mrb[0].mxu0
      %v211 = vadd.f32 %v139, %v210
      %212 = vdwg.mxu0
      %213 = vmatprep.subr.mxu0 %v71
      %214 = vmatpush1.msra.mxu0 %v70
      %215 = vmatprep.subr.mxu0 %v75
      %216 = vmatpush1.msra.mxu0 %v74
      %217 = vmatprep.subr.mxu0 %v79
      %218 = vmatpush1.msra.mxu0 %v78
      %219 = vmatprep.subr.mxu0 %v83
      %220 = vmatpush1.msra.mxu0 %v82
      %221 = vmatprep.subr.mxu0 %v87
      %222 = vmatpush1.msra.mxu0 %v86
      %223 = vmatprep.subr.mxu0 %v91
      %224 = vmatpush1.msra.mxu0 %v90
      %225 = vmatprep.subr.mxu0 %v95
      %226 = vmatpush1.msra.mxu0 %v94
      %227 = vmatprep.subr.mxu0 %v99
      %228 = vmatpush1.msra.mxu0 %v98
      %229 = vmatprep.subr.mxu0 %v103
      %230 = vmatpush1.msra.mxu0 %v102
      %231 = vmatprep.subr.mxu0 %v107
      %232 = vmatpush1.msra.mxu0 %v106
      %233 = vmatprep.subr.mxu0 %v111
      %234 = vmatpush1.msra.mxu0 %v110
      %235 = vmatprep.subr.mxu0 %v115
      %236 = vmatpush1.msra.mxu0 %v114
      %237 = vmatprep.subr.mxu0 %v119
      %238 = vmatpush1.msra.mxu0 %v118
      %239 = vmatprep.subr.mxu0 %v123
      %240 = vmatpush1.msra.mxu0 %v122
      %241 = vmatprep.subr.mxu0 %v127
      %242 = vmatpush1.msra.mxu0 %v126
      %243 = vmatprep.subr.mxu0 %v131
      %244 = vmatpush1.msra.mxu0 %v130
      %245 = vmatprep.subr.mxu0 0.0
      %246 = vmatpush1.msra.mxu0 0.0
      %247 = vmatprep.subr.mxu0 0.0
      %248 = vmatpush1.msra.mxu0 0.0
      %249 = vmatprep.subr.mxu0 0.0
      %250 = vmatpush1.msra.mxu0 0.0
      %251 = vmatprep.subr.mxu0 0.0
      %252 = vmatpush1.msra.mxu0 0.0
      %253 = vmatprep.subr.mxu0 0.0
      %254 = vmatpush1.msra.mxu0 0.0
      %255 = vmatprep.subr.mxu0 0.0
      %256 = vmatpush1.msra.mxu0 0.0
      %257 = vmatprep.subr.mxu0 0.0
      %258 = vmatpush1.msra.mxu0 0.0
      %259 = vmatprep.subr.mxu0 0.0
      %260 = vmatpush1.msra.mxu0 0.0
      %261 = vmatprep.subr.mxu0 0.0
      %262 = vmatpush1.msra.mxu0 0.0
      %263 = vmatprep.subr.mxu0 0.0
      %264 = vmatpush1.msra.mxu0 0.0
      %265 = vmatprep.subr.mxu0 0.0
      %266 = vmatpush1.msra.mxu0 0.0
      %267 = vmatprep.subr.mxu0 0.0
      %268 = vmatpush1.msra.mxu0 0.0
      %269 = vmatprep.subr.mxu0 0.0
      %270 = vmatpush1.msra.mxu0 0.0
      %271 = vmatprep.subr.mxu0 0.0
      %272 = vmatpush1.msra.mxu0 0.0
      %273 = vmatprep.subr.mxu0 0.0
      %274 = vmatpush1.msra.mxu0 0.0
      %275 = vmatprep.subr.mxu0 0.0
      %276 = vmatpush1.msra.mxu0 0.0
      %277 = vmatprep.mubr.f32.mxu0 0.0
      %278 = vmatmul.mubr.f32.gmra.mrb[0].mxu0 %v132
      %v279 = vpop.f32.mrb[0].mxu0
      %v280 = vadd.f32 %v140, %v279
      %v281 = vpop.f32.mrb[0].mxu0
      %v282 = vadd.f32 %v141, %v281
      %283 = vdwg.mxu0
      %v284 = vxor.u32 %v209, 2147483648
      %v285 = vmul.f32 %v284, 1.442695
      %v286 = vpow.pop %v285
      %v287 = vadd.f32 %v286, 1.0
      %v288 = vrcp.pop %v287
      %v289 = vmul.f32 1.0, %v288
      %v290 = vxor.u32 %v211, 2147483648
      %v291 = vmul.f32 %v290, 1.442695
      %v292 = vpow.pop %v291
      %v293 = vadd.f32 %v292, 1.0
      %v294 = vrcp.pop %v293
      %v295 = vmul.f32 1.0, %v294
      %v296 = vtanh.pop %v280
      %v297 = vxor.u32 %v282, 2147483648
      %v298 = vmul.f32 %v297, 1.442695
      %v299 = vpow.pop %v298
      %v300 = vadd.f32 %v299, 1.0
      %v301 = vrcp.pop %v300
      %v302 = vmul.f32 1.0, %v301
      %v303 = vmul.f32 %v295, %v133
      %v304 = vmul.f32 %v289, %v296
      %v305 = vadd.f32 %v303, %v304
      %v306 = vtanh.pop %v305
      %v307 = vmul.f32 %v302, %v306
      %v308 = vstv %s41
      %vm309 = vcmp.lt.s32.totalorder %v308, %v137
      %v310 = vsel %vm309, %v307, %v132
      %v311 = vsel %vm309, %v305, %v133
      %s312 = scalar_lea.vmem [#allocation11], 32
      %v313 = vld [vmem:[%s312] sm:$0xff]
      %v314 = vld [vmem:[%s312 + $0x8] sm:$0xff]
      %v315 = vld [vmem:[%s312 + $0x10] sm:$0xff]
      %v316 = vld [vmem:[%s312 + $0x18] sm:$0xff]
      %317 = vmatprep.subr.mxu0 %v69
      %318 = vmatpush1.msra.mxu0 %v68
      %319 = vmatprep.subr.mxu0 %v73
      %320 = vmatpush1.msra.mxu0 %v72
      %321 = vmatprep.subr.mxu0 %v77
      %322 = vmatpush1.msra.mxu0 %v76
      %323 = vmatprep.subr.mxu0 %v81
      %324 = vmatpush1.msra.mxu0 %v80
      %325 = vmatprep.subr.mxu0 %v85
      %326 = vmatpush1.msra.mxu0 %v84
      %327 = vmatprep.subr.mxu0 %v89
      %328 = vmatpush1.msra.mxu0 %v88
      %329 = vmatprep.subr.mxu0 %v93
      %330 = vmatpush1.msra.mxu0 %v92
      %331 = vmatprep.subr.mxu0 %v97
      %332 = vmatpush1.msra.mxu0 %v96
      %333 = vmatprep.subr.mxu0 %v101
      %334 = vmatpush1.msra.mxu0 %v100
      %335 = vmatprep.subr.mxu0 %v105
      %336 = vmatpush1.msra.mxu0 %v104
      %337 = vmatprep.subr.mxu0 %v109
      %338 = vmatpush1.msra.mxu0 %v108
      %339 = vmatprep.subr.mxu0 %v113
      %340 = vmatpush1.msra.mxu0 %v112
      %341 = vmatprep.subr.mxu0 %v117
      %342 = vmatpush1.msra.mxu0 %v116
      %343 = vmatprep.subr.mxu0 %v121
      %344 = vmatpush1.msra.mxu0 %v120
      %345 = vmatprep.subr.mxu0 %v125
      %346 = vmatpush1.msra.mxu0 %v124
      %347 = vmatprep.subr.mxu0 %v129
      %348 = vmatpush1.msra.mxu0 %v128
      %349 = vmatprep.subr.mxu0 0.0
      %350 = vmatpush1.msra.mxu0 0.0
      %351 = vmatprep.subr.mxu0 0.0
      %352 = vmatpush1.msra.mxu0 0.0
      %353 = vmatprep.subr.mxu0 0.0
      %354 = vmatpush1.msra.mxu0 0.0
      %355 = vmatprep.subr.mxu0 0.0
      %356 = vmatpush1.msra.mxu0 0.0
      %357 = vmatprep.subr.mxu0 0.0
      %358 = vmatpush1.msra.mxu0 0.0
      %359 = vmatprep.subr.mxu0 0.0
      %360 = vmatpush1.msra.mxu0 0.0
      %361 = vmatprep.subr.mxu0 0.0
      %362 = vmatpush1.msra.mxu0 0.0
      %363 = vmatprep.subr.mxu0 0.0
      %364 = vmatpush1.msra.mxu0 0.0
      %365 = vmatprep.subr.mxu0 0.0
      %366 = vmatpush1.msra.mxu0 0.0
      %367 = vmatprep.subr.mxu0 0.0
      %368 = vmatpush1.msra.mxu0 0.0
      %369 = vmatprep.subr.mxu0 0.0
      %370 = vmatpush1.msra.mxu0 0.0
      %371 = vmatprep.subr.mxu0 0.0
      %372 = vmatpush1.msra.mxu0 0.0
      %373 = vmatprep.subr.mxu0 0.0
      %374 = vmatpush1.msra.mxu0 0.0
      %375 = vmatprep.subr.mxu0 0.0
      %376 = vmatpush1.msra.mxu0 0.0
      %377 = vmatprep.subr.mxu0 0.0
      %378 = vmatpush1.msra.mxu0 0.0
      %379 = vmatprep.subr.mxu0 0.0
      %380 = vmatpush1.msra.mxu0 0.0
      %381 = vmatprep.mubr.f32.mxu0 0.0
      %382 = vmatmul.mubr.f32.gmra.mrb[0].mxu0 %v310
      %v383 = vpop.f32.mrb[0].mxu0
      %v384 = vadd.f32 %v313, %v383
      %v385 = vpop.f32.mrb[0].mxu0
      %v386 = vadd.f32 %v314, %v385
      %387 = vdwg.mxu0
      %388 = vmatprep.subr.mxu0 %v71
      %389 = vmatpush1.msra.mxu0 %v70
      %390 = vmatprep.subr.mxu0 %v75
      %391 = vmatpush1.msra.mxu0 %v74
      %392 = vmatprep.subr.mxu0 %v79
      %393 = vmatpush1.msra.mxu0 %v78
      %394 = vmatprep.subr.mxu0 %v83
      %395 = vmatpush1.msra.mxu0 %v82
      %396 = vmatprep.subr.mxu0 %v87
      %397 = vmatpush1.msra.mxu0 %v86
      %398 = vmatprep.subr.mxu0 %v91
      %399 = vmatpush1.msra.mxu0 %v90
      %400 = vmatprep.subr.mxu0 %v95
      %401 = vmatpush1.msra.mxu0 %v94
      %402 = vmatprep.subr.mxu0 %v99
      %403 = vmatpush1.msra.mxu0 %v98
      %404 = vmatprep.subr.mxu0 %v103
      %405 = vmatpush1.msra.mxu0 %v102
      %406 = vmatprep.subr.mxu0 %v107
      %407 = vmatpush1.msra.mxu0 %v106
      %408 = vmatprep.subr.mxu0 %v111
      %409 = vmatpush1.msra.mxu0 %v110
      %410 = vmatprep.subr.mxu0 %v115
      %411 = vmatpush1.msra.mxu0 %v114
      %412 = vmatprep.subr.mxu0 %v119
      %413 = vmatpush1.msra.mxu0 %v118
      %414 = vmatprep.subr.mxu0 %v123
      %415 = vmatpush1.msra.mxu0 %v122
      %416 = vmatprep.subr.mxu0 %v127
      %417 = vmatpush1.msra.mxu0 %v126
      %418 = vmatprep.subr.mxu0 %v131
      %419 = vmatpush1.msra.mxu0 %v130
      %420 = vmatprep.subr.mxu0 0.0
      %421 = vmatpush1.msra.mxu0 0.0
      %422 = vmatprep.subr.mxu0 0.0
      %423 = vmatpush1.msra.mxu0 0.0
      %424 = vmatprep.subr.mxu0 0.0
      %425 = vmatpush1.msra.mxu0 0.0
      %426 = vmatprep.subr.mxu0 0.0
      %427 = vmatpush1.msra.mxu0 0.0
      %428 = vmatprep.subr.mxu0 0.0
      %429 = vmatpush1.msra.mxu0 0.0
      %430 = vmatprep.subr.mxu0 0.0
      %431 = vmatpush1.msra.mxu0 0.0
      %432 = vmatprep.subr.mxu0 0.0
      %433 = vmatpush1.msra.mxu0 0.0
      %434 = vmatprep.subr.mxu0 0.0
      %435 = vmatpush1.msra.mxu0 0.0
      %436 = vmatprep.subr.mxu0 0.0
      %437 = vmatpush1.msra.mxu0 0.0
      %438 = vmatprep.subr.mxu0 0.0
      %439 = vmatpush1.msra.mxu0 0.0
      %440 = vmatprep.subr.mxu0 0.0
      %441 = vmatpush1.msra.mxu0 0.0
      %442 = vmatprep.subr.mxu0 0.0
      %443 = vmatpush1.msra.mxu0 0.0
      %444 = vmatprep.subr.mxu0 0.0
      %445 = vmatpush1.msra.mxu0 0.0
      %446 = vmatprep.subr.mxu0 0.0
      %447 = vmatpush1.msra.mxu0 0.0
      %448 = vmatprep.subr.mxu0 0.0
      %449 = vmatpush1.msra.mxu0 0.0
      %450 = vmatprep.subr.mxu0 0.0
      %451 = vmatpush1.msra.mxu0 0.0
      %452 = vmatprep.mubr.f32.mxu0 0.0
      %453 = vmatmul.mubr.f32.gmra.mrb[0].mxu0 %v310
      %v454 = vpop.f32.mrb[0].mxu0
      %v455 = vadd.f32 %v315, %v454
      %v456 = vpop.f32.mrb[0].mxu0
      %v457 = vadd.f32 %v316, %v456
      %458 = vdwg.mxu0
      %v459 = vxor.u32 %v384, 2147483648
      %v460 = vmul.f32 %v459, 1.442695
      %v461 = vpow.pop %v460
      %v462 = vadd.f32 %v461, 1.0
      %v463 = vrcp.pop %v462
      %v464 = vmul.f32 1.0, %v463
      %v465 = vxor.u32 %v386, 2147483648
      %v466 = vmul.f32 %v465, 1.442695
      %v467 = vpow.pop %v466
      %v468 = vadd.f32 %v467, 1.0
      %v469 = vrcp.pop %v468
      %v470 = vmul.f32 1.0, %v469
      %v471 = vtanh.pop %v455
      %v472 = vxor.u32 %v457, 2147483648
      %v473 = vmul.f32 %v472, 1.442695
      %v474 = vpow.pop %v473
      %v475 = vadd.f32 %v474, 1.0
      %v476 = vrcp.pop %v475
      %v477 = vmul.f32 1.0, %v476
      %v478 = vmul.f32 %v470, %v311
      %v479 = vmul.f32 %v464, %v471
      %v480 = vadd.f32 %v478, %v479
      %v481 = vtanh.pop %v480
      %v482 = vmul.f32 %v477, %v481
      %s483 = sadd.s32 %s41, 1
      %v484 = vstv %s483
      %vm485 = vcmp.lt.s32.totalorder %v484, %v137
      %v486 = vsel %vm485, %v482, %v310
      %v487 = vsel %vm485, %v480, %v311
      %s488 = scalar_lea.vmem [#allocation11], 64
      %v489 = vld [vmem:[%s488] sm:$0xff]
      %v490 = vld [vmem:[%s488 + $0x8] sm:$0xff]
      %v491 = vld [vmem:[%s488 + $0x10] sm:$0xff]
      %v492 = vld [vmem:[%s488 + $0x18] sm:$0xff]
      %493 = vmatprep.subr.mxu0 %v69
      %494 = vmatpush1.msra.mxu0 %v68
      %495 = vmatprep.subr.mxu0 %v73
      %496 = vmatpush1.msra.mxu0 %v72
      %497 = vmatprep.subr.mxu0 %v77
      %498 = vmatpush1.msra.mxu0 %v76
      %499 = vmatprep.subr.mxu0 %v81
      %500 = vmatpush1.msra.mxu0 %v80
      %501 = vmatprep.subr.mxu0 %v85
      %502 = vmatpush1.msra.mxu0 %v84
      %503 = vmatprep.subr.mxu0 %v89
      %504 = vmatpush1.msra.mxu0 %v88
      %505 = vmatprep.subr.mxu0 %v93
      %506 = vmatpush1.msra.mxu0 %v92
      %507 = vmatprep.subr.mxu0 %v97
      %508 = vmatpush1.msra.mxu0 %v96
      %509 = vmatprep.subr.mxu0 %v101
      %510 = vmatpush1.msra.mxu0 %v100
      %511 = vmatprep.subr.mxu0 %v105
      %512 = vmatpush1.msra.mxu0 %v104
      %513 = vmatprep.subr.mxu0 %v109
      %514 = vmatpush1.msra.mxu0 %v108
      %515 = vmatprep.subr.mxu0 %v113
      %516 = vmatpush1.msra.mxu0 %v112
      %517 = vmatprep.subr.mxu0 %v117
      %518 = vmatpush1.msra.mxu0 %v116
      %519 = vmatprep.subr.mxu0 %v121
      %520 = vmatpush1.msra.mxu0 %v120
      %521 = vmatprep.subr.mxu0 %v125
      %522 = vmatpush1.msra.mxu0 %v124
      %523 = vmatprep.subr.mxu0 %v129
      %524 = vmatpush1.msra.mxu0 %v128
      %525 = vmatprep.subr.mxu0 0.0
      %526 = vmatpush1.msra.mxu0 0.0
      %527 = vmatprep.subr.mxu0 0.0
      %528 = vmatpush1.msra.mxu0 0.0
      %529 = vmatprep.subr.mxu0 0.0
      %530 = vmatpush1.msra.mxu0 0.0
      %531 = vmatprep.subr.mxu0 0.0
      %532 = vmatpush1.msra.mxu0 0.0
      %533 = vmatprep.subr.mxu0 0.0
      %534 = vmatpush1.msra.mxu0 0.0
      %535 = vmatprep.subr.mxu0 0.0
      %536 = vmatpush1.msra.mxu0 0.0
      %537 = vmatprep.subr.mxu0 0.0
      %538 = vmatpush1.msra.mxu0 0.0
      %539 = vmatprep.subr.mxu0 0.0
      %540 = vmatpush1.msra.mxu0 0.0
      %541 = vmatprep.subr.mxu0 0.0
      %542 = vmatpush1.msra.mxu0 0.0
      %543 = vmatprep.subr.mxu0 0.0
      %544 = vmatpush1.msra.mxu0 0.0
      %545 = vmatprep.subr.mxu0 0.0
      %546 = vmatpush1.msra.mxu0 0.0
      %547 = vmatprep.subr.mxu0 0.0
      %548 = vmatpush1.msra.mxu0 0.0
      %549 = vmatprep.subr.mxu0 0.0
      %550 = vmatpush1.msra.mxu0 0.0
      %551 = vmatprep.subr.mxu0 0.0
      %552 = vmatpush1.msra.mxu0 0.0
      %553 = vmatprep.subr.mxu0 0.0
      %554 = vmatpush1.msra.mxu0 0.0
      %555 = vmatprep.subr.mxu0 0.0
      %556 = vmatpush1.msra.mxu0 0.0
      %557 = vmatprep.mubr.f32.mxu0 0.0
      %558 = vmatmul.mubr.f32.gmra.mrb[0].mxu0 %v486
      %v559 = vpop.f32.mrb[0].mxu0
      %v560 = vadd.f32 %v489, %v559
      %v561 = vpop.f32.mrb[0].mxu0
      %v562 = vadd.f32 %v490, %v561
      %563 = vdwg.mxu0
      %564 = vmatprep.subr.mxu0 %v71
      %565 = vmatpush1.msra.mxu0 %v70
      %566 = vmatprep.subr.mxu0 %v75
      %567 = vmatpush1.msra.mxu0 %v74
      %568 = vmatprep.subr.mxu0 %v79
      %569 = vmatpush1.msra.mxu0 %v78
      %570 = vmatprep.subr.mxu0 %v83
      %571 = vmatpush1.msra.mxu0 %v82
      %572 = vmatprep.subr.mxu0 %v87
      %573 = vmatpush1.msra.mxu0 %v86
      %574 = vmatprep.subr.mxu0 %v91
      %575 = vmatpush1.msra.mxu0 %v90
      %576 = vmatprep.subr.mxu0 %v95
      %577 = vmatpush1.msra.mxu0 %v94
      %578 = vmatprep.subr.mxu0 %v99
      %579 = vmatpush1.msra.mxu0 %v98
      %580 = vmatprep.subr.mxu0 %v103
      %581 = vmatpush1.msra.mxu0 %v102
      %582 = vmatprep.subr.mxu0 %v107
      %583 = vmatpush1.msra.mxu0 %v106
      %584 = vmatprep.subr.mxu0 %v111
      %585 = vmatpush1.msra.mxu0 %v110
      %586 = vmatprep.subr.mxu0 %v115
      %587 = vmatpush1.msra.mxu0 %v114
      %588 = vmatprep.subr.mxu0 %v119
      %589 = vmatpush1.msra.mxu0 %v118
      %590 = vmatprep.subr.mxu0 %v123
      %591 = vmatpush1.msra.mxu0 %v122
      %592 = vmatprep.subr.mxu0 %v127
      %593 = vmatpush1.msra.mxu0 %v126
      %594 = vmatprep.subr.mxu0 %v131
      %595 = vmatpush1.msra.mxu0 %v130
      %596 = vmatprep.subr.mxu0 0.0
      %597 = vmatpush1.msra.mxu0 0.0
      %598 = vmatprep.subr.mxu0 0.0
      %599 = vmatpush1.msra.mxu0 0.0
      %600 = vmatprep.subr.mxu0 0.0
      %601 = vmatpush1.msra.mxu0 0.0
      %602 = vmatprep.subr.mxu0 0.0
      %603 = vmatpush1.msra.mxu0 0.0
      %604 = vmatprep.subr.mxu0 0.0
      %605 = vmatpush1.msra.mxu0 0.0
      %606 = vmatprep.subr.mxu0 0.0
      %607 = vmatpush1.msra.mxu0 0.0
      %608 = vmatprep.subr.mxu0 0.0
      %609 = vmatpush1.msra.mxu0 0.0
      %610 = vmatprep.subr.mxu0 0.0
      %611 = vmatpush1.msra.mxu0 0.0
      %612 = vmatprep.subr.mxu0 0.0
      %613 = vmatpush1.msra.mxu0 0.0
      %614 = vmatprep.subr.mxu0 0.0
      %615 = vmatpush1.msra.mxu0 0.0
      %616 = vmatprep.subr.mxu0 0.0
      %617 = vmatpush1.msra.mxu0 0.0
      %618 = vmatprep.subr.mxu0 0.0
      %619 = vmatpush1.msra.mxu0 0.0
      %620 = vmatprep.subr.mxu0 0.0
      %621 = vmatpush1.msra.mxu0 0.0
      %622 = vmatprep.subr.mxu0 0.0
      %623 = vmatpush1.msra.mxu0 0.0
      %624 = vmatprep.subr.mxu0 0.0
      %625 = vmatpush1.msra.mxu0 0.0
      %626 = vmatprep.subr.mxu0 0.0
      %627 = vmatpush1.msra.mxu0 0.0
      %628 = vmatprep.mubr.f32.mxu0 0.0
      %629 = vmatmul.mubr.f32.gmra.mrb[0].mxu0 %v486
      %v630 = vpop.f32.mrb[0].mxu0
      %v631 = vadd.f32 %v491, %v630
      %v632 = vpop.f32.mrb[0].mxu0
      %v633 = vadd.f32 %v492, %v632
      %634 = vdwg.mxu0
      %v635 = vxor.u32 %v560, 2147483648
      %v636 = vmul.f32 %v635, 1.442695
      %v637 = vpow.pop %v636
      %v638 = vadd.f32 %v637, 1.0
      %v639 = vrcp.pop %v638
      %v640 = vmul.f32 1.0, %v639
      %v641 = vxor.u32 %v562, 2147483648
      %v642 = vmul.f32 %v641, 1.442695
      %v643 = vpow.pop %v642
      %v644 = vadd.f32 %v643, 1.0
      %v645 = vrcp.pop %v644
      %v646 = vmul.f32 1.0, %v645
      %v647 = vtanh.pop %v631
      %v648 = vxor.u32 %v633, 2147483648
      %v649 = vmul.f32 %v648, 1.442695
      %v650 = vpow.pop %v649
      %v651 = vadd.f32 %v650, 1.0
      %v652 = vrcp.pop %v651
      %v653 = vmul.f32 1.0, %v652
      %v654 = vmul.f32 %v646, %v487
      %v655 = vmul.f32 %v640, %v647
      %v656 = vadd.f32 %v654, %v655
      %v657 = vtanh.pop %v656
      %v658 = vmul.f32 %v653, %v657
      %s659 = sadd.s32 %s41, 2
      %v660 = vstv %s659
      %vm661 = vcmp.lt.s32.totalorder %v660, %v137
      %v662 = vsel %vm661, %v658, %v486
      %v663 = vsel %vm661, %v656, %v487
      %s664 = scalar_lea.vmem [#allocation11], 96
      %v665 = vld [vmem:[%s664] sm:$0xff]
      %v666 = vld [vmem:[%s664 + $0x8] sm:$0xff]
      %v667 = vld [vmem:[%s664 + $0x10] sm:$0xff]
      %v668 = vld [vmem:[%s664 + $0x18] sm:$0xff]
      %669 = vmatprep.subr.mxu0 %v69
      %670 = vmatpush1.msra.mxu0 %v68
      %671 = vmatprep.subr.mxu0 %v73
      %672 = vmatpush1.msra.mxu0 %v72
      %673 = vmatprep.subr.mxu0 %v77
      %674 = vmatpush1.msra.mxu0 %v76
      %675 = vmatprep.subr.mxu0 %v81
      %676 = vmatpush1.msra.mxu0 %v80
      %677 = vmatprep.subr.mxu0 %v85
      %678 = vmatpush1.msra.mxu0 %v84
      %679 = vmatprep.subr.mxu0 %v89
      %680 = vmatpush1.msra.mxu0 %v88
      %681 = vmatprep.subr.mxu0 %v93
      %682 = vmatpush1.msra.mxu0 %v92
      %683 = vmatprep.subr.mxu0 %v97
      %684 = vmatpush1.msra.mxu0 %v96
      %685 = vmatprep.subr.mxu0 %v101
      %686 = vmatpush1.msra.mxu0 %v100
      %687 = vmatprep.subr.mxu0 %v105
      %688 = vmatpush1.msra.mxu0 %v104
      %689 = vmatprep.subr.mxu0 %v109
      %690 = vmatpush1.msra.mxu0 %v108
      %691 = vmatprep.subr.mxu0 %v113
      %692 = vmatpush1.msra.mxu0 %v112
      %693 = vmatprep.subr.mxu0 %v117
      %694 = vmatpush1.msra.mxu0 %v116
      %695 = vmatprep.subr.mxu0 %v121
      %696 = vmatpush1.msra.mxu0 %v120
      %697 = vmatprep.subr.mxu0 %v125
      %698 = vmatpush1.msra.mxu0 %v124
      %699 = vmatprep.subr.mxu0 %v129
      %700 = vmatpush1.msra.mxu0 %v128
      %701 = vmatprep.subr.mxu0 0.0
      %702 = vmatpush1.msra.mxu0 0.0
      %703 = vmatprep.subr.mxu0 0.0
      %704 = vmatpush1.msra.mxu0 0.0
      %705 = vmatprep.subr.mxu0 0.0
      %706 = vmatpush1.msra.mxu0 0.0
      %707 = vmatprep.subr.mxu0 0.0
      %708 = vmatpush1.msra.mxu0 0.0
      %709 = vmatprep.subr.mxu0 0.0
      %710 = vmatpush1.msra.mxu0 0.0
      %711 = vmatprep.subr.mxu0 0.0
      %712 = vmatpush1.msra.mxu0 0.0
      %713 = vmatprep.subr.mxu0 0.0
      %714 = vmatpush1.msra.mxu0 0.0
      %715 = vmatprep.subr.mxu0 0.0
      %716 = vmatpush1.msra.mxu0 0.0
      %717 = vmatprep.subr.mxu0 0.0
      %718 = vmatpush1.msra.mxu0 0.0
      %719 = vmatprep.subr.mxu0 0.0
      %720 = vmatpush1.msra.mxu0 0.0
      %721 = vmatprep.subr.mxu0 0.0
      %722 = vmatpush1.msra.mxu0 0.0
      %723 = vmatprep.subr.mxu0 0.0
      %724 = vmatpush1.msra.mxu0 0.0
      %725 = vmatprep.subr.mxu0 0.0
      %726 = vmatpush1.msra.mxu0 0.0
      %727 = vmatprep.subr.mxu0 0.0
      %728 = vmatpush1.msra.mxu0 0.0
      %729 = vmatprep.subr.mxu0 0.0
      %730 = vmatpush1.msra.mxu0 0.0
      %731 = vmatprep.subr.mxu0 0.0
      %732 = vmatpush1.msra.mxu0 0.0
      %733 = vmatprep.mubr.f32.mxu0 0.0
      %734 = vmatmul.mubr.f32.gmra.mrb[0].mxu0 %v662
      %v735 = vpop.f32.mrb[0].mxu0
      %v736 = vadd.f32 %v665, %v735
      %v737 = vpop.f32.mrb[0].mxu0
      %v738 = vadd.f32 %v666, %v737
      %739 = vdwg.mxu0
      %740 = vmatprep.subr.mxu0 %v71
      %741 = vmatpush1.msra.mxu0 %v70
      %742 = vmatprep.subr.mxu0 %v75
      %743 = vmatpush1.msra.mxu0 %v74
      %744 = vmatprep.subr.mxu0 %v79
      %745 = vmatpush1.msra.mxu0 %v78
      %746 = vmatprep.subr.mxu0 %v83
      %747 = vmatpush1.msra.mxu0 %v82
      %748 = vmatprep.subr.mxu0 %v87
      %749 = vmatpush1.msra.mxu0 %v86
      %750 = vmatprep.subr.mxu0 %v91
      %751 = vmatpush1.msra.mxu0 %v90
      %752 = vmatprep.subr.mxu0 %v95
      %753 = vmatpush1.msra.mxu0 %v94
      %754 = vmatprep.subr.mxu0 %v99
      %755 = vmatpush1.msra.mxu0 %v98
      %756 = vmatprep.subr.mxu0 %v103
      %757 = vmatpush1.msra.mxu0 %v102
      %758 = vmatprep.subr.mxu0 %v107
      %759 = vmatpush1.msra.mxu0 %v106
      %760 = vmatprep.subr.mxu0 %v111
      %761 = vmatpush1.msra.mxu0 %v110
      %762 = vmatprep.subr.mxu0 %v115
      %763 = vmatpush1.msra.mxu0 %v114
      %764 = vmatprep.subr.mxu0 %v119
      %765 = vmatpush1.msra.mxu0 %v118
      %766 = vmatprep.subr.mxu0 %v123
      %767 = vmatpush1.msra.mxu0 %v122
      %768 = vmatprep.subr.mxu0 %v127
      %769 = vmatpush1.msra.mxu0 %v126
      %770 = vmatprep.subr.mxu0 %v131
      %771 = vmatpush1.msra.mxu0 %v130
      %772 = vmatprep.subr.mxu0 0.0
      %773 = vmatpush1.msra.mxu0 0.0
      %774 = vmatprep.subr.mxu0 0.0
      %775 = vmatpush1.msra.mxu0 0.0
      %776 = vmatprep.subr.mxu0 0.0
      %777 = vmatpush1.msra.mxu0 0.0
      %778 = vmatprep.subr.mxu0 0.0
      %779 = vmatpush1.msra.mxu0 0.0
      %780 = vmatprep.subr.mxu0 0.0
      %781 = vmatpush1.msra.mxu0 0.0
      %782 = vmatprep.subr.mxu0 0.0
      %783 = vmatpush1.msra.mxu0 0.0
      %784 = vmatprep.subr.mxu0 0.0
      %785 = vmatpush1.msra.mxu0 0.0
      %786 = vmatprep.subr.mxu0 0.0
      %787 = vmatpush1.msra.mxu0 0.0
      %788 = vmatprep.subr.mxu0 0.0
      %789 = vmatpush1.msra.mxu0 0.0
      %790 = vmatprep.subr.mxu0 0.0
      %791 = vmatpush1.msra.mxu0 0.0
      %792 = vmatprep.subr.mxu0 0.0
      %793 = vmatpush1.msra.mxu0 0.0
      %794 = vmatprep.subr.mxu0 0.0
      %795 = vmatpush1.msra.mxu0 0.0
      %796 = vmatprep.subr.mxu0 0.0
      %797 = vmatpush1.msra.mxu0 0.0
      %798 = vmatprep.subr.mxu0 0.0
      %799 = vmatpush1.msra.mxu0 0.0
      %800 = vmatprep.subr.mxu0 0.0
      %801 = vmatpush1.msra.mxu0 0.0
      %802 = vmatprep.subr.mxu0 0.0
      %803 = vmatpush1.msra.mxu0 0.0
      %804 = vmatprep.mubr.f32.mxu0 0.0
      %805 = vmatmul.mubr.f32.gmra.mrb[0].mxu0 %v662
      %v806 = vpop.f32.mrb[0].mxu0
      %v807 = vadd.f32 %v667, %v806
      %v808 = vpop.f32.mrb[0].mxu0
      %v809 = vadd.f32 %v668, %v808
      %810 = vdwg.mxu0
      %v811 = vxor.u32 %v736, 2147483648
      %v812 = vmul.f32 %v811, 1.442695
      %v813 = vpow.pop %v812
      %v814 = vadd.f32 %v813, 1.0
      %v815 = vrcp.pop %v814
      %v816 = vmul.f32 1.0, %v815
      %v817 = vxor.u32 %v738, 2147483648
      %v818 = vmul.f32 %v817, 1.442695
      %v819 = vpow.pop %v818
      %v820 = vadd.f32 %v819, 1.0
      %v821 = vrcp.pop %v820
      %v822 = vmul.f32 1.0, %v821
      %v823 = vtanh.pop %v807
      %v824 = vxor.u32 %v809, 2147483648
      %v825 = vmul.f32 %v824, 1.442695
      %v826 = vpow.pop %v825
      %v827 = vadd.f32 %v826, 1.0
      %v828 = vrcp.pop %v827
      %v829 = vmul.f32 1.0, %v828
      %v830 = vmul.f32 %v822, %v663
      %v831 = vmul.f32 %v816, %v823
      %v832 = vadd.f32 %v830, %v831
      %v833 = vtanh.pop %v832
      %v834 = vmul.f32 %v829, %v833
      %s835 = sadd.s32 %s41, 3
      %v836 = vstv %s835
      %vm837 = vcmp.lt.s32.totalorder %v836, %v137
      %v838 = vsel %vm837, %v834, %v662
      %v839 = vsel %vm837, %v832, %v663
      %s840 = scalar_lea.vmem [#allocation11], 128
      %v841 = vld [vmem:[%s840] sm:$0xff]
      %v842 = vld [vmem:[%s840 + $0x8] sm:$0xff]
      %v843 = vld [vmem:[%s840 + $0x10] sm:$0xff]
      %v844 = vld [vmem:[%s840 + $0x18] sm:$0xff]
      %845 = vmatprep.subr.mxu0 %v69
      %846 = vmatpush1.msra.mxu0 %v68
      %847 = vmatprep.subr.mxu0 %v73
      %848 = vmatpush1.msra.mxu0 %v72
      %849 = vmatprep.subr.mxu0 %v77
      %850 = vmatpush1.msra.mxu0 %v76
      %851 = vmatprep.subr.mxu0 %v81
      %852 = vmatpush1.msra.mxu0 %v80
      %853 = vmatprep.subr.mxu0 %v85
      %854 = vmatpush1.msra.mxu0 %v84
      %855 = vmatprep.subr.mxu0 %v89
      %856 = vmatpush1.msra.mxu0 %v88
      %857 = vmatprep.subr.mxu0 %v93
      %858 = vmatpush1.msra.mxu0 %v92
      %859 = vmatprep.subr.mxu0 %v97
      %860 = vmatpush1.msra.mxu0 %v96
      %861 = vmatprep.subr.mxu0 %v101
      %862 = vmatpush1.msra.mxu0 %v100
      %863 = vmatprep.subr.mxu0 %v105
      %864 = vmatpush1.msra.mxu0 %v104
      %865 = vmatprep.subr.mxu0 %v109
      %866 = vmatpush1.msra.mxu0 %v108
      %867 = vmatprep.subr.mxu0 %v113
      %868 = vmatpush1.msra.mxu0 %v112
      %869 = vmatprep.subr.mxu0 %v117
      %870 = vmatpush1.msra.mxu0 %v116
      %871 = vmatprep.subr.mxu0 %v121
      %872 = vmatpush1.msra.mxu0 %v120
      %873 = vmatprep.subr.mxu0 %v125
      %874 = vmatpush1.msra.mxu0 %v124
      %875 = vmatprep.subr.mxu0 %v129
      %876 = vmatpush1.msra.mxu0 %v128
      %877 = vmatprep.subr.mxu0 0.0
      %878 = vmatpush1.msra.mxu0 0.0
      %879 = vmatprep.subr.mxu0 0.0
      %880 = vmatpush1.msra.mxu0 0.0
      %881 = vmatprep.subr.mxu0 0.0
      %882 = vmatpush1.msra.mxu0 0.0
      %883 = vmatprep.subr.mxu0 0.0
      %884 = vmatpush1.msra.mxu0 0.0
      %885 = vmatprep.subr.mxu0 0.0
      %886 = vmatpush1.msra.mxu0 0.0
      %887 = vmatprep.subr.mxu0 0.0
      %888 = vmatpush1.msra.mxu0 0.0
      %889 = vmatprep.subr.mxu0 0.0
      %890 = vmatpush1.msra.mxu0 0.0
      %891 = vmatprep.subr.mxu0 0.0
      %892 = vmatpush1.msra.mxu0 0.0
      %893 = vmatprep.subr.mxu0 0.0
      %894 = vmatpush1.msra.mxu0 0.0
      %895 = vmatprep.subr.mxu0 0.0
      %896 = vmatpush1.msra.mxu0 0.0
      %897 = vmatprep.subr.mxu0 0.0
      %898 = vmatpush1.msra.mxu0 0.0
      %899 = vmatprep.subr.mxu0 0.0
      %900 = vmatpush1.msra.mxu0 0.0
      %901 = vmatprep.subr.mxu0 0.0
      %902 = vmatpush1.msra.mxu0 0.0
      %903 = vmatprep.subr.mxu0 0.0
      %904 = vmatpush1.msra.mxu0 0.0
      %905 = vmatprep.subr.mxu0 0.0
      %906 = vmatpush1.msra.mxu0 0.0
      %907 = vmatprep.subr.mxu0 0.0
      %908 = vmatpush1.msra.mxu0 0.0
      %909 = vmatprep.mubr.f32.mxu0 0.0
      %910 = vmatmul.mubr.f32.gmra.mrb[0].mxu0 %v838
      %v911 = vpop.f32.mrb[0].mxu0
      %v912 = vadd.f32 %v841, %v911
      %v913 = vpop.f32.mrb[0].mxu0
      %v914 = vadd.f32 %v842, %v913
      %915 = vdwg.mxu0
      %916 = vmatprep.subr.mxu0 %v71
      %917 = vmatpush1.msra.mxu0 %v70
      %918 = vmatprep.subr.mxu0 %v75
      %919 = vmatpush1.msra.mxu0 %v74
      %920 = vmatprep.subr.mxu0 %v79
      %921 = vmatpush1.msra.mxu0 %v78
      %922 = vmatprep.subr.mxu0 %v83
      %923 = vmatpush1.msra.mxu0 %v82
      %924 = vmatprep.subr.mxu0 %v87
      %925 = vmatpush1.msra.mxu0 %v86
      %926 = vmatprep.subr.mxu0 %v91
      %927 = vmatpush1.msra.mxu0 %v90
      %928 = vmatprep.subr.mxu0 %v95
      %929 = vmatpush1.msra.mxu0 %v94
      %930 = vmatprep.subr.mxu0 %v99
      %931 = vmatpush1.msra.mxu0 %v98
      %932 = vmatprep.subr.mxu0 %v103
      %933 = vmatpush1.msra.mxu0 %v102
      %934 = vmatprep.subr.mxu0 %v107
      %935 = vmatpush1.msra.mxu0 %v106
      %936 = vmatprep.subr.mxu0 %v111
      %937 = vmatpush1.msra.mxu0 %v110
      %938 = vmatprep.subr.mxu0 %v115
      %939 = vmatpush1.msra.mxu0 %v114
      %940 = vmatprep.subr.mxu0 %v119
      %941 = vmatpush1.msra.mxu0 %v118
      %942 = vmatprep.subr.mxu0 %v123
      %943 = vmatpush1.msra.mxu0 %v122
      %944 = vmatprep.subr.mxu0 %v127
      %945 = vmatpush1.msra.mxu0 %v126
      %946 = vmatprep.subr.mxu0 %v131
      %947 = vmatpush1.msra.mxu0 %v130
      %948 = vmatprep.subr.mxu0 0.0
      %949 = vmatpush1.msra.mxu0 0.0
      %950 = vmatprep.subr.mxu0 0.0
      %951 = vmatpush1.msra.mxu0 0.0
      %952 = vmatprep.subr.mxu0 0.0
      %953 = vmatpush1.msra.mxu0 0.0
      %954 = vmatprep.subr.mxu0 0.0
      %955 = vmatpush1.msra.mxu0 0.0
      %956 = vmatprep.subr.mxu0 0.0
      %957 = vmatpush1.msra.mxu0 0.0
      %958 = vmatprep.subr.mxu0 0.0
      %959 = vmatpush1.msra.mxu0 0.0
      %960 = vmatprep.subr.mxu0 0.0
      %961 = vmatpush1.msra.mxu0 0.0
      %962 = vmatprep.subr.mxu0 0.0
      %963 = vmatpush1.msra.mxu0 0.0
      %964 = vmatprep.subr.mxu0 0.0
      %965 = vmatpush1.msra.mxu0 0.0
      %966 = vmatprep.subr.mxu0 0.0
      %967 = vmatpush1.msra.mxu0 0.0
      %968 = vmatprep.subr.mxu0 0.0
      %969 = vmatpush1.msra.mxu0 0.0
      %970 = vmatprep.subr.mxu0 0.0
      %971 = vmatpush1.msra.mxu0 0.0
      %972 = vmatprep.subr.mxu0 0.0
      %973 = vmatpush1.msra.mxu0 0.0
      %974 = vmatprep.subr.mxu0 0.0
      %975 = vmatpush1.msra.mxu0 0.0
      %976 = vmatprep.subr.mxu0 0.0
      %977 = vmatpush1.msra.mxu0 0.0
      %978 = vmatprep.subr.mxu0 0.0
      %979 = vmatpush1.msra.mxu0 0.0
      %980 = vmatprep.mubr.f32.mxu0 0.0
      %981 = vmatmul.mubr.f32.gmra.mrb[0].mxu0 %v838
      %v982 = vpop.f32.mrb[0].mxu0
      %v983 = vadd.f32 %v843, %v982
      %v984 = vpop.f32.mrb[0].mxu0
      %v985 = vadd.f32 %v844, %v984
      %986 = vdwg.mxu0
      %v987 = vxor.u32 %v912, 2147483648
      %v988 = vmul.f32 %v987, 1.442695
      %v989 = vpow.pop %v988
      %v990 = vadd.f32 %v989, 1.0
      %v991 = vrcp.pop %v990
      %v992 = vmul.f32 1.0, %v991
      %v993 = vxor.u32 %v914, 2147483648
      %v994 = vmul.f32 %v993, 1.442695
      %v995 = vpow.pop %v994
      %v996 = vadd.f32 %v995, 1.0
      %v997 = vrcp.pop %v996
      %v998 = vmul.f32 1.0, %v997
      %v999 = vtanh.pop %v983
      %v1000 = vxor.u32 %v985, 2147483648
      %v1001 = vmul.f32 %v1000, 1.442695
      %v1002 = vpow.pop %v1001
      %v1003 = vadd.f32 %v1002, 1.0
      %v1004 = vrcp.pop %v1003
      %v1005 = vmul.f32 1.0, %v1004
      %v1006 = vmul.f32 %v998, %v839
      %v1007 = vmul.f32 %v992, %v999
      %v1008 = vadd.f32 %v1006, %v1007
      %v1009 = vtanh.pop %v1008
      %v1010 = vmul.f32 %v1005, %v1009
      %s1011 = sadd.s32 %s41, 4
      %v1012 = vstv %s1011
      %vm1013 = vcmp.lt.s32.totalorder %v1012, %v137
      %v1014 = vsel %vm1013, %v1010, %v838
      %v1015 = vsel %vm1013, %v1008, %v839
      %s1016 = scalar_lea.vmem [#allocation11], 160
      %v1017 = vld [vmem:[%s1016] sm:$0xff]
      %v1018 = vld [vmem:[%s1016 + $0x8] sm:$0xff]
      %v1019 = vld [vmem:[%s1016 + $0x10] sm:$0xff]
      %v1020 = vld [vmem:[%s1016 + $0x18] sm:$0xff]
      %1021 = vmatprep.subr.mxu0 %v69
      %1022 = vmatpush1.msra.mxu0 %v68
      %1023 = vmatprep.subr.mxu0 %v73
      %1024 = vmatpush1.msra.mxu0 %v72
      %1025 = vmatprep.subr.mxu0 %v77
      %1026 = vmatpush1.msra.mxu0 %v76
      %1027 = vmatprep.subr.mxu0 %v81
      %1028 = vmatpush1.msra.mxu0 %v80
      %1029 = vmatprep.subr.mxu0 %v85
      %1030 = vmatpush1.msra.mxu0 %v84
      %1031 = vmatprep.subr.mxu0 %v89
      %1032 = vmatpush1.msra.mxu0 %v88
      %1033 = vmatprep.subr.mxu0 %v93
      %1034 = vmatpush1.msra.mxu0 %v92
      %1035 = vmatprep.subr.mxu0 %v97
      %1036 = vmatpush1.msra.mxu0 %v96
      %1037 = vmatprep.subr.mxu0 %v101
      %1038 = vmatpush1.msra.mxu0 %v100
      %1039 = vmatprep.subr.mxu0 %v105
      %1040 = vmatpush1.msra.mxu0 %v104
      %1041 = vmatprep.subr.mxu0 %v109
      %1042 = vmatpush1.msra.mxu0 %v108
      %1043 = vmatprep.subr.mxu0 %v113
      %1044 = vmatpush1.msra.mxu0 %v112
      %1045 = vmatprep.subr.mxu0 %v117
      %1046 = vmatpush1.msra.mxu0 %v116
      %1047 = vmatprep.subr.mxu0 %v121
      %1048 = vmatpush1.msra.mxu0 %v120
      %1049 = vmatprep.subr.mxu0 %v125
      %1050 = vmatpush1.msra.mxu0 %v124
      %1051 = vmatprep.subr.mxu0 %v129
      %1052 = vmatpush1.msra.mxu0 %v128
      %1053 = vmatprep.subr.mxu0 0.0
      %1054 = vmatpush1.msra.mxu0 0.0
      %1055 = vmatprep.subr.mxu0 0.0
      %1056 = vmatpush1.msra.mxu0 0.0
      %1057 = vmatprep.subr.mxu0 0.0
      %1058 = vmatpush1.msra.mxu0 0.0
      %1059 = vmatprep.subr.mxu0 0.0
      %1060 = vmatpush1.msra.mxu0 0.0
      %1061 = vmatprep.subr.mxu0 0.0
      %1062 = vmatpush1.msra.mxu0 0.0
      %1063 = vmatprep.subr.mxu0 0.0
      %1064 = vmatpush1.msra.mxu0 0.0
      %1065 = vmatprep.subr.mxu0 0.0
      %1066 = vmatpush1.msra.mxu0 0.0
      %1067 = vmatprep.subr.mxu0 0.0
      %1068 = vmatpush1.msra.mxu0 0.0
      %1069 = vmatprep.subr.mxu0 0.0
      %1070 = vmatpush1.msra.mxu0 0.0
      %1071 = vmatprep.subr.mxu0 0.0
      %1072 = vmatpush1.msra.mxu0 0.0
      %1073 = vmatprep.subr.mxu0 0.0
      %1074 = vmatpush1.msra.mxu0 0.0
      %1075 = vmatprep.subr.mxu0 0.0
      %1076 = vmatpush1.msra.mxu0 0.0
      %1077 = vmatprep.subr.mxu0 0.0
      %1078 = vmatpush1.msra.mxu0 0.0
      %1079 = vmatprep.subr.mxu0 0.0
      %1080 = vmatpush1.msra.mxu0 0.0
      %1081 = vmatprep.subr.mxu0 0.0
      %1082 = vmatpush1.msra.mxu0 0.0
      %1083 = vmatprep.subr.mxu0 0.0
      %1084 = vmatpush1.msra.mxu0 0.0
      %1085 = vmatprep.mubr.f32.mxu0 0.0
      %1086 = vmatmul.mubr.f32.gmra.mrb[0].mxu0 %v1014
      %v1087 = vpop.f32.mrb[0].mxu0
      %v1088 = vadd.f32 %v1017, %v1087
      %v1089 = vpop.f32.mrb[0].mxu0
      %v1090 = vadd.f32 %v1018, %v1089
      %1091 = vdwg.mxu0
      %1092 = vmatprep.subr.mxu0 %v71
      %1093 = vmatpush1.msra.mxu0 %v70
      %1094 = vmatprep.subr.mxu0 %v75
      %1095 = vmatpush1.msra.mxu0 %v74
      %1096 = vmatprep.subr.mxu0 %v79
      %1097 = vmatpush1.msra.mxu0 %v78
      %1098 = vmatprep.subr.mxu0 %v83
      %1099 = vmatpush1.msra.mxu0 %v82
      %1100 = vmatprep.subr.mxu0 %v87
      %1101 = vmatpush1.msra.mxu0 %v86
      %1102 = vmatprep.subr.mxu0 %v91
      %1103 = vmatpush1.msra.mxu0 %v90
      %1104 = vmatprep.subr.mxu0 %v95
      %1105 = vmatpush1.msra.mxu0 %v94
      %1106 = vmatprep.subr.mxu0 %v99
      %1107 = vmatpush1.msra.mxu0 %v98
      %1108 = vmatprep.subr.mxu0 %v103
      %1109 = vmatpush1.msra.mxu0 %v102
      %1110 = vmatprep.subr.mxu0 %v107
      %1111 = vmatpush1.msra.mxu0 %v106
      %1112 = vmatprep.subr.mxu0 %v111
      %1113 = vmatpush1.msra.mxu0 %v110
      %1114 = vmatprep.subr.mxu0 %v115
      %1115 = vmatpush1.msra.mxu0 %v114
      %1116 = vmatprep.subr.mxu0 %v119
      %1117 = vmatpush1.msra.mxu0 %v118
      %1118 = vmatprep.subr.mxu0 %v123
      %1119 = vmatpush1.msra.mxu0 %v122
      %1120 = vmatprep.subr.mxu0 %v127
      %1121 = vmatpush1.msra.mxu0 %v126
      %1122 = vmatprep.subr.mxu0 %v131
      %1123 = vmatpush1.msra.mxu0 %v130
      %1124 = vmatprep.subr.mxu0 0.0
      %1125 = vmatpush1.msra.mxu0 0.0
      %1126 = vmatprep.subr.mxu0 0.0
      %1127 = vmatpush1.msra.mxu0 0.0
      %1128 = vmatprep.subr.mxu0 0.0
      %1129 = vmatpush1.msra.mxu0 0.0
      %1130 = vmatprep.subr.mxu0 0.0
      %1131 = vmatpush1.msra.mxu0 0.0
      %1132 = vmatprep.subr.mxu0 0.0
      %1133 = vmatpush1.msra.mxu0 0.0
      %1134 = vmatprep.subr.mxu0 0.0
      %1135 = vmatpush1.msra.mxu0 0.0
      %1136 = vmatprep.subr.mxu0 0.0
      %1137 = vmatpush1.msra.mxu0 0.0
      %1138 = vmatprep.subr.mxu0 0.0
      %1139 = vmatpush1.msra.mxu0 0.0
      %1140 = vmatprep.subr.mxu0 0.0
      %1141 = vmatpush1.msra.mxu0 0.0
      %1142 = vmatprep.subr.mxu0 0.0
      %1143 = vmatpush1.msra.mxu0 0.0
      %1144 = vmatprep.subr.mxu0 0.0
      %1145 = vmatpush1.msra.mxu0 0.0
      %1146 = vmatprep.subr.mxu0 0.0
      %1147 = vmatpush1.msra.mxu0 0.0
      %1148 = vmatprep.subr.mxu0 0.0
      %1149 = vmatpush1.msra.mxu0 0.0
      %1150 = vmatprep.subr.mxu0 0.0
      %1151 = vmatpush1.msra.mxu0 0.0
      %1152 = vmatprep.subr.mxu0 0.0
      %1153 = vmatpush1.msra.mxu0 0.0
      %1154 = vmatprep.subr.mxu0 0.0
      %1155 = vmatpush1.msra.mxu0 0.0
      %1156 = vmatprep.mubr.f32.mxu0 0.0
      %1157 = vmatmul.mubr.f32.gmra.mrb[0].mxu0 %v1014
      %v1158 = vpop.f32.mrb[0].mxu0
      %v1159 = vadd.f32 %v1019, %v1158
      %v1160 = vpop.f32.mrb[0].mxu0
      %v1161 = vadd.f32 %v1020, %v1160
      %1162 = vdwg.mxu0
      %v1163 = vxor.u32 %v1088, 2147483648
      %v1164 = vmul.f32 %v1163, 1.442695
      %v1165 = vpow.pop %v1164
      %v1166 = vadd.f32 %v1165, 1.0
      %v1167 = vrcp.pop %v1166
      %v1168 = vmul.f32 1.0, %v1167
      %v1169 = vxor.u32 %v1090, 2147483648
      %v1170 = vmul.f32 %v1169, 1.442695
      %v1171 = vpow.pop %v1170
      %v1172 = vadd.f32 %v1171, 1.0
      %v1173 = vrcp.pop %v1172
      %v1174 = vmul.f32 1.0, %v1173
      %v1175 = vtanh.pop %v1159
      %v1176 = vxor.u32 %v1161, 2147483648
      %v1177 = vmul.f32 %v1176, 1.442695
      %v1178 = vpow.pop %v1177
      %v1179 = vadd.f32 %v1178, 1.0
      %v1180 = vrcp.pop %v1179
      %v1181 = vmul.f32 1.0, %v1180
      %v1182 = vmul.f32 %v1174, %v1015
      %v1183 = vmul.f32 %v1168, %v1175
      %v1184 = vadd.f32 %v1182, %v1183
      %v1185 = vtanh.pop %v1184
      %v1186 = vmul.f32 %v1181, %v1185
      %s1187 = sadd.s32 %s41, 5
      %v1188 = vstv %s1187
      %vm1189 = vcmp.lt.s32.totalorder %v1188, %v137
      %v1190 = vsel %vm1189, %v1186, %v1014
      %v1191 = vsel %vm1189, %v1184, %v1015
      %s1192 = scalar_lea.vmem [#allocation11], 192
      %v1193 = vld [vmem:[%s1192] sm:$0xff]
      %v1194 = vld [vmem:[%s1192 + $0x8] sm:$0xff]
      %v1195 = vld [vmem:[%s1192 + $0x10] sm:$0xff]
      %v1196 = vld [vmem:[%s1192 + $0x18] sm:$0xff]
      %1197 = vmatprep.subr.mxu0 %v69
      %1198 = vmatpush1.msra.mxu0 %v68
      %1199 = vmatprep.subr.mxu0 %v73
      %1200 = vmatpush1.msra.mxu0 %v72
      %1201 = vmatprep.subr.mxu0 %v77
      %1202 = vmatpush1.msra.mxu0 %v76
      %1203 = vmatprep.subr.mxu0 %v81
      %1204 = vmatpush1.msra.mxu0 %v80
      %1205 = vmatprep.subr.mxu0 %v85
      %1206 = vmatpush1.msra.mxu0 %v84
      %1207 = vmatprep.subr.mxu0 %v89
      %1208 = vmatpush1.msra.mxu0 %v88
      %1209 = vmatprep.subr.mxu0 %v93
      %1210 = vmatpush1.msra.mxu0 %v92
      %1211 = vmatprep.subr.mxu0 %v97
      %1212 = vmatpush1.msra.mxu0 %v96
      %1213 = vmatprep.subr.mxu0 %v101
      %1214 = vmatpush1.msra.mxu0 %v100
      %1215 = vmatprep.subr.mxu0 %v105
      %1216 = vmatpush1.msra.mxu0 %v104
      %1217 = vmatprep.subr.mxu0 %v109
      %1218 = vmatpush1.msra.mxu0 %v108
      %1219 = vmatprep.subr.mxu0 %v113
      %1220 = vmatpush1.msra.mxu0 %v112
      %1221 = vmatprep.subr.mxu0 %v117
      %1222 = vmatpush1.msra.mxu0 %v116
      %1223 = vmatprep.subr.mxu0 %v121
      %1224 = vmatpush1.msra.mxu0 %v120
      %1225 = vmatprep.subr.mxu0 %v125
      %1226 = vmatpush1.msra.mxu0 %v124
      %1227 = vmatprep.subr.mxu0 %v129
      %1228 = vmatpush1.msra.mxu0 %v128
      %1229 = vmatprep.subr.mxu0 0.0
      %1230 = vmatpush1.msra.mxu0 0.0
      %1231 = vmatprep.subr.mxu0 0.0
      %1232 = vmatpush1.msra.mxu0 0.0
      %1233 = vmatprep.subr.mxu0 0.0
      %1234 = vmatpush1.msra.mxu0 0.0
      %1235 = vmatprep.subr.mxu0 0.0
      %1236 = vmatpush1.msra.mxu0 0.0
      %1237 = vmatprep.subr.mxu0 0.0
      %1238 = vmatpush1.msra.mxu0 0.0
      %1239 = vmatprep.subr.mxu0 0.0
      %1240 = vmatpush1.msra.mxu0 0.0
      %1241 = vmatprep.subr.mxu0 0.0
      %1242 = vmatpush1.msra.mxu0 0.0
      %1243 = vmatprep.subr.mxu0 0.0
      %1244 = vmatpush1.msra.mxu0 0.0
      %1245 = vmatprep.subr.mxu0 0.0
      %1246 = vmatpush1.msra.mxu0 0.0
      %1247 = vmatprep.subr.mxu0 0.0
      %1248 = vmatpush1.msra.mxu0 0.0
      %1249 = vmatprep.subr.mxu0 0.0
      %1250 = vmatpush1.msra.mxu0 0.0
      %1251 = vmatprep.subr.mxu0 0.0
      %1252 = vmatpush1.msra.mxu0 0.0
      %1253 = vmatprep.subr.mxu0 0.0
      %1254 = vmatpush1.msra.mxu0 0.0
      %1255 = vmatprep.subr.mxu0 0.0
      %1256 = vmatpush1.msra.mxu0 0.0
      %1257 = vmatprep.subr.mxu0 0.0
      %1258 = vmatpush1.msra.mxu0 0.0
      %1259 = vmatprep.subr.mxu0 0.0
      %1260 = vmatpush1.msra.mxu0 0.0
      %1261 = vmatprep.mubr.f32.mxu0 0.0
      %1262 = vmatmul.mubr.f32.gmra.mrb[0].mxu0 %v1190
      %v1263 = vpop.f32.mrb[0].mxu0
      %v1264 = vadd.f32 %v1193, %v1263
      %v1265 = vpop.f32.mrb[0].mxu0
      %v1266 = vadd.f32 %v1194, %v1265
      %1267 = vdwg.mxu0
      %1268 = vmatprep.subr.mxu0 %v71
      %1269 = vmatpush1.msra.mxu0 %v70
      %1270 = vmatprep.subr.mxu0 %v75
      %1271 = vmatpush1.msra.mxu0 %v74
      %1272 = vmatprep.subr.mxu0 %v79
      %1273 = vmatpush1.msra.mxu0 %v78
      %1274 = vmatprep.subr.mxu0 %v83
      %1275 = vmatpush1.msra.mxu0 %v82
      %1276 = vmatprep.subr.mxu0 %v87
      %1277 = vmatpush1.msra.mxu0 %v86
      %1278 = vmatprep.subr.mxu0 %v91
      %1279 = vmatpush1.msra.mxu0 %v90
      %1280 = vmatprep.subr.mxu0 %v95
      %1281 = vmatpush1.msra.mxu0 %v94
      %1282 = vmatprep.subr.mxu0 %v99
      %1283 = vmatpush1.msra.mxu0 %v98
      %1284 = vmatprep.subr.mxu0 %v103
      %1285 = vmatpush1.msra.mxu0 %v102
      %1286 = vmatprep.subr.mxu0 %v107
      %1287 = vmatpush1.msra.mxu0 %v106
      %1288 = vmatprep.subr.mxu0 %v111
      %1289 = vmatpush1.msra.mxu0 %v110
      %1290 = vmatprep.subr.mxu0 %v115
      %1291 = vmatpush1.msra.mxu0 %v114
      %1292 = vmatprep.subr.mxu0 %v119
      %1293 = vmatpush1.msra.mxu0 %v118
      %1294 = vmatprep.subr.mxu0 %v123
      %1295 = vmatpush1.msra.mxu0 %v122
      %1296 = vmatprep.subr.mxu0 %v127
      %1297 = vmatpush1.msra.mxu0 %v126
      %1298 = vmatprep.subr.mxu0 %v131
      %1299 = vmatpush1.msra.mxu0 %v130
      %1300 = vmatprep.subr.mxu0 0.0
      %1301 = vmatpush1.msra.mxu0 0.0
      %1302 = vmatprep.subr.mxu0 0.0
      %1303 = vmatpush1.msra.mxu0 0.0
      %1304 = vmatprep.subr.mxu0 0.0
      %1305 = vmatpush1.msra.mxu0 0.0
      %1306 = vmatprep.subr.mxu0 0.0
      %1307 = vmatpush1.msra.mxu0 0.0
      %1308 = vmatprep.subr.mxu0 0.0
      %1309 = vmatpush1.msra.mxu0 0.0
      %1310 = vmatprep.subr.mxu0 0.0
      %1311 = vmatpush1.msra.mxu0 0.0
      %1312 = vmatprep.subr.mxu0 0.0
      %1313 = vmatpush1.msra.mxu0 0.0
      %1314 = vmatprep.subr.mxu0 0.0
      %1315 = vmatpush1.msra.mxu0 0.0
      %1316 = vmatprep.subr.mxu0 0.0
      %1317 = vmatpush1.msra.mxu0 0.0
      %1318 = vmatprep.subr.mxu0 0.0
      %1319 = vmatpush1.msra.mxu0 0.0
      %1320 = vmatprep.subr.mxu0 0.0
      %1321 = vmatpush1.msra.mxu0 0.0
      %1322 = vmatprep.subr.mxu0 0.0
      %1323 = vmatpush1.msra.mxu0 0.0
      %1324 = vmatprep.subr.mxu0 0.0
      %1325 = vmatpush1.msra.mxu0 0.0
      %1326 = vmatprep.subr.mxu0 0.0
      %1327 = vmatpush1.msra.mxu0 0.0
      %1328 = vmatprep.subr.mxu0 0.0
      %1329 = vmatpush1.msra.mxu0 0.0
      %1330 = vmatprep.subr.mxu0 0.0
      %1331 = vmatpush1.msra.mxu0 0.0
      %1332 = vmatprep.mubr.f32.mxu0 0.0
      %1333 = vmatmul.mubr.f32.gmra.mrb[0].mxu0 %v1190
      %v1334 = vpop.f32.mrb[0].mxu0
      %v1335 = vadd.f32 %v1195, %v1334
      %v1336 = vpop.f32.mrb[0].mxu0
      %v1337 = vadd.f32 %v1196, %v1336
      %1338 = vdwg.mxu0
      %v1339 = vxor.u32 %v1264, 2147483648
      %v1340 = vmul.f32 %v1339, 1.442695
      %v1341 = vpow.pop %v1340
      %v1342 = vadd.f32 %v1341, 1.0
      %v1343 = vrcp.pop %v1342
      %v1344 = vmul.f32 1.0, %v1343
      %v1345 = vxor.u32 %v1266, 2147483648
      %v1346 = vmul.f32 %v1345, 1.442695
      %v1347 = vpow.pop %v1346
      %v1348 = vadd.f32 %v1347, 1.0
      %v1349 = vrcp.pop %v1348
      %v1350 = vmul.f32 1.0, %v1349
      %v1351 = vtanh.pop %v1335
      %v1352 = vxor.u32 %v1337, 2147483648
      %v1353 = vmul.f32 %v1352, 1.442695
      %v1354 = vpow.pop %v1353
      %v1355 = vadd.f32 %v1354, 1.0
      %v1356 = vrcp.pop %v1355
      %v1357 = vmul.f32 1.0, %v1356
      %v1358 = vmul.f32 %v1350, %v1191
      %v1359 = vmul.f32 %v1344, %v1351
      %v1360 = vadd.f32 %v1358, %v1359
      %v1361 = vtanh.pop %v1360
      %v1362 = vmul.f32 %v1357, %v1361
      %s1363 = sadd.s32 %s41, 6
      %v1364 = vstv %s1363
      %vm1365 = vcmp.lt.s32.totalorder %v1364, %v137
      %v1366 = vsel %vm1365, %v1362, %v1190
      %v1367 = vsel %vm1365, %v1360, %v1191
      %s1368 = scalar_lea.vmem [#allocation11], 224
      %v1369 = vld [vmem:[%s1368] sm:$0xff]
      %v1370 = vld [vmem:[%s1368 + $0x8] sm:$0xff]
      %v1371 = vld [vmem:[%s1368 + $0x10] sm:$0xff]
      %v1372 = vld [vmem:[%s1368 + $0x18] sm:$0xff]
      %1373 = vmatprep.subr.mxu0 %v69
      %1374 = vmatpush1.msra.mxu0 %v68
      %1375 = vmatprep.subr.mxu0 %v73
      %1376 = vmatpush1.msra.mxu0 %v72
      %1377 = vmatprep.subr.mxu0 %v77
      %1378 = vmatpush1.msra.mxu0 %v76
      %1379 = vmatprep.subr.mxu0 %v81
      %1380 = vmatpush1.msra.mxu0 %v80
      %1381 = vmatprep.subr.mxu0 %v85
      %1382 = vmatpush1.msra.mxu0 %v84
      %1383 = vmatprep.subr.mxu0 %v89
      %1384 = vmatpush1.msra.mxu0 %v88
      %1385 = vmatprep.subr.mxu0 %v93
      %1386 = vmatpush1.msra.mxu0 %v92
      %1387 = vmatprep.subr.mxu0 %v97
      %1388 = vmatpush1.msra.mxu0 %v96
      %1389 = vmatprep.subr.mxu0 %v101
      %1390 = vmatpush1.msra.mxu0 %v100
      %1391 = vmatprep.subr.mxu0 %v105
      %1392 = vmatpush1.msra.mxu0 %v104
      %1393 = vmatprep.subr.mxu0 %v109
      %1394 = vmatpush1.msra.mxu0 %v108
      %1395 = vmatprep.subr.mxu0 %v113
      %1396 = vmatpush1.msra.mxu0 %v112
      %1397 = vmatprep.subr.mxu0 %v117
      %1398 = vmatpush1.msra.mxu0 %v116
      %1399 = vmatprep.subr.mxu0 %v121
      %1400 = vmatpush1.msra.mxu0 %v120
      %1401 = vmatprep.subr.mxu0 %v125
      %1402 = vmatpush1.msra.mxu0 %v124
      %1403 = vmatprep.subr.mxu0 %v129
      %1404 = vmatpush1.msra.mxu0 %v128
      %1405 = vmatprep.subr.mxu0 0.0
      %1406 = vmatpush1.msra.mxu0 0.0
      %1407 = vmatprep.subr.mxu0 0.0
      %1408 = vmatpush1.msra.mxu0 0.0
      %1409 = vmatprep.subr.mxu0 0.0
      %1410 = vmatpush1.msra.mxu0 0.0
      %1411 = vmatprep.subr.mxu0 0.0
      %1412 = vmatpush1.msra.mxu0 0.0
      %1413 = vmatprep.subr.mxu0 0.0
      %1414 = vmatpush1.msra.mxu0 0.0
      %1415 = vmatprep.subr.mxu0 0.0
      %1416 = vmatpush1.msra.mxu0 0.0
      %1417 = vmatprep.subr.mxu0 0.0
      %1418 = vmatpush1.msra.mxu0 0.0
      %1419 = vmatprep.subr.mxu0 0.0
      %1420 = vmatpush1.msra.mxu0 0.0
      %1421 = vmatprep.subr.mxu0 0.0
      %1422 = vmatpush1.msra.mxu0 0.0
      %1423 = vmatprep.subr.mxu0 0.0
      %1424 = vmatpush1.msra.mxu0 0.0
      %1425 = vmatprep.subr.mxu0 0.0
      %1426 = vmatpush1.msra.mxu0 0.0
      %1427 = vmatprep.subr.mxu0 0.0
      %1428 = vmatpush1.msra.mxu0 0.0
      %1429 = vmatprep.subr.mxu0 0.0
      %1430 = vmatpush1.msra.mxu0 0.0
      %1431 = vmatprep.subr.mxu0 0.0
      %1432 = vmatpush1.msra.mxu0 0.0
      %1433 = vmatprep.subr.mxu0 0.0
      %1434 = vmatpush1.msra.mxu0 0.0
      %1435 = vmatprep.subr.mxu0 0.0
      %1436 = vmatpush1.msra.mxu0 0.0
      %1437 = vmatprep.mubr.f32.mxu0 0.0
      %1438 = vmatmul.mubr.f32.gmra.mrb[0].mxu0 %v1366
      %v1439 = vpop.f32.mrb[0].mxu0
      %v1440 = vadd.f32 %v1369, %v1439
      %v1441 = vpop.f32.mrb[0].mxu0
      %v1442 = vadd.f32 %v1370, %v1441
      %1443 = vdwg.mxu0
      %1444 = vmatprep.subr.mxu0 %v71
      %1445 = vmatpush1.msra.mxu0 %v70
      %1446 = vmatprep.subr.mxu0 %v75
      %1447 = vmatpush1.msra.mxu0 %v74
      %1448 = vmatprep.subr.mxu0 %v79
      %1449 = vmatpush1.msra.mxu0 %v78
      %1450 = vmatprep.subr.mxu0 %v83
      %1451 = vmatpush1.msra.mxu0 %v82
      %1452 = vmatprep.subr.mxu0 %v87
      %1453 = vmatpush1.msra.mxu0 %v86
      %1454 = vmatprep.subr.mxu0 %v91
      %1455 = vmatpush1.msra.mxu0 %v90
      %1456 = vmatprep.subr.mxu0 %v95
      %1457 = vmatpush1.msra.mxu0 %v94
      %1458 = vmatprep.subr.mxu0 %v99
      %1459 = vmatpush1.msra.mxu0 %v98
      %1460 = vmatprep.subr.mxu0 %v103
      %1461 = vmatpush1.msra.mxu0 %v102
      %1462 = vmatprep.subr.mxu0 %v107
      %1463 = vmatpush1.msra.mxu0 %v106
      %1464 = vmatprep.subr.mxu0 %v111
      %1465 = vmatpush1.msra.mxu0 %v110
      %1466 = vmatprep.subr.mxu0 %v115
      %1467 = vmatpush1.msra.mxu0 %v114
      %1468 = vmatprep.subr.mxu0 %v119
      %1469 = vmatpush1.msra.mxu0 %v118
      %1470 = vmatprep.subr.mxu0 %v123
      %1471 = vmatpush1.msra.mxu0 %v122
      %1472 = vmatprep.subr.mxu0 %v127
      %1473 = vmatpush1.msra.mxu0 %v126
      %1474 = vmatprep.subr.mxu0 %v131
      %1475 = vmatpush1.msra.mxu0 %v130
      %1476 = vmatprep.subr.mxu0 0.0
      %1477 = vmatpush1.msra.mxu0 0.0
      %1478 = vmatprep.subr.mxu0 0.0
      %1479 = vmatpush1.msra.mxu0 0.0
      %1480 = vmatprep.subr.mxu0 0.0
      %1481 = vmatpush1.msra.mxu0 0.0
      %1482 = vmatprep.subr.mxu0 0.0
      %1483 = vmatpush1.msra.mxu0 0.0
      %1484 = vmatprep.subr.mxu0 0.0
      %1485 = vmatpush1.msra.mxu0 0.0
      %1486 = vmatprep.subr.mxu0 0.0
      %1487 = vmatpush1.msra.mxu0 0.0
      %1488 = vmatprep.subr.mxu0 0.0
      %1489 = vmatpush1.msra.mxu0 0.0
      %1490 = vmatprep.subr.mxu0 0.0
      %1491 = vmatpush1.msra.mxu0 0.0
      %1492 = vmatprep.subr.mxu0 0.0
      %1493 = vmatpush1.msra.mxu0 0.0
      %1494 = vmatprep.subr.mxu0 0.0
      %1495 = vmatpush1.msra.mxu0 0.0
      %1496 = vmatprep.subr.mxu0 0.0
      %1497 = vmatpush1.msra.mxu0 0.0
      %1498 = vmatprep.subr.mxu0 0.0
      %1499 = vmatpush1.msra.mxu0 0.0
      %1500 = vmatprep.subr.mxu0 0.0
      %1501 = vmatpush1.msra.mxu0 0.0
      %1502 = vmatprep.subr.mxu0 0.0
      %1503 = vmatpush1.msra.mxu0 0.0
      %1504 = vmatprep.subr.mxu0 0.0
      %1505 = vmatpush1.msra.mxu0 0.0
      %1506 = vmatprep.subr.mxu0 0.0
      %1507 = vmatpush1.msra.mxu0 0.0
      %1508 = vmatprep.mubr.f32.mxu0 0.0
      %1509 = vmatmul.mubr.f32.gmra.mrb[0].mxu0 %v1366
      %v1510 = vpop.f32.mrb[0].mxu0
      %v1511 = vadd.f32 %v1371, %v1510
      %v1512 = vpop.f32.mrb[0].mxu0
      %v1513 = vadd.f32 %v1372, %v1512
      %1514 = vdwg.mxu0
      %v1515 = vxor.u32 %v1440, 2147483648
      %v1516 = vmul.f32 %v1515, 1.442695
      %v1517 = vpow.pop %v1516
      %v1518 = vadd.f32 %v1517, 1.0
      %v1519 = vrcp.pop %v1518
      %v1520 = vmul.f32 1.0, %v1519
      %v1521 = vxor.u32 %v1442, 2147483648
      %v1522 = vmul.f32 %v1521, 1.442695
      %v1523 = vpow.pop %v1522
      %v1524 = vadd.f32 %v1523, 1.0
      %v1525 = vrcp.pop %v1524
      %v1526 = vmul.f32 1.0, %v1525
      %v1527 = vtanh.pop %v1511
      %v1528 = vxor.u32 %v1513, 2147483648
      %v1529 = vmul.f32 %v1528, 1.442695
      %v1530 = vpow.pop %v1529
      %v1531 = vadd.f32 %v1530, 1.0
      %v1532 = vrcp.pop %v1531
      %v1533 = vmul.f32 1.0, %v1532
      %v1534 = vmul.f32 %v1526, %v1367
      %v1535 = vmul.f32 %v1520, %v1527
      %v1536 = vadd.f32 %v1534, %v1535
      %v1537 = vtanh.pop %v1536
      %v1538 = vmul.f32 %v1533, %v1537
      %s1539 = sadd.s32 %s41, 7
      %v1540 = vstv %s1539
      %vm1541 = vcmp.lt.s32.totalorder %v1540, %v137
      %v1542 = vsel %vm1541, %v1538, %v1366
      %v1543 = vsel %vm1541, %v1536, %v1367
      %1544 = vst [vmem:[#allocation2] sm:$0xff] %v1542
      %1545 = vst [vmem:[#allocation3] sm:$0xff] %v1543
    $region29: #{tpu_custom_call.1} parent=1 // pred_fallthru
      _
    // Predicated region
    $region30: #{tpu_custom_call.1} parent=1 // pred_check
      %p1546 = pneg %p42
    $region31: #{tpu_custom_call.1} parent=1 // pred_check_branch
      %1548 = sbr.rel (%p1546) target = $region33
    $region32: #{tpu_custom_call.1} parent=1 // pred_region
      %v1549 = vld [vmem:[#allocation2] sm:$0xff]
      %1550 = vst [vmem:[#allocation13] sm:$0xff] %v1549
    $region33: #{tpu_custom_call.1} parent=1 // pred_fallthru
      _
    // Predicated region
    $region34: #{tpu_custom_call.1} parent=1 // pred_check
      _
    $region35: #{tpu_custom_call.1} parent=1 // pred_check_branch
      %1552 = sbr.rel (0) target = $region37
    $region36: #{tpu_custom_call.1} parent=1 // pred_region
      %s1554 = ssub.s32 128, 128
      %1555 = vsyncadd [#allocation10], %s1554
      %s1557 = sshll.u32 [#allocation13], 4
      %s1558 = int_to_ptr.vmem [resolvable:$true] %s1557
      %1560 = dma.vmem_to_hbm [thread:$0]  %s1558, 128, %s4, [#allocation10]
    $region37: #{tpu_custom_call.1} parent=1 // pred_fallthru
      _
    // Predicated region
    $region38: #{tpu_custom_call.1} parent=1 // pred_check
      _
    $region39: #{tpu_custom_call.1} parent=1 // pred_check_branch
      %1562 = sbr.rel (0) target = $region41
    $region40: #{tpu_custom_call.1} parent=1 // pred_region
      %1563 = dma.done [#allocation10], 128
    $region41: #{tpu_custom_call.1} parent=1 // pred_fallthru
      _
    %1564 = vsyncpa [#allocation9], 1
    %1565 = vsyncpa [#allocation12], 1
    %1566 = vsyncpa [#allocation10], 1
  %1567 = vsyncmov [#allocation5]
  %s1568 = vpop.sfrf %1567
  %p1569 = scmp.eq.s32.totalorder %s1568, 0
  %p1570 = pneg %p1569
  %1572 = shalt.err (%p1570)

</llo_original>
